<compile_context>
chip_gen: v7x
topology: tpu7x:2x2x1
jax: 0.10.0
libtpu: 0.0.40
codegen_flags: <defaults>
</compile_context>

<pallas_src>
import functools
import math

import jax
import jax.numpy as jnp
import numpy as np
from jax.experimental import pallas as pl
from jax.experimental.pallas import tpu as pltpu


# ----------------------------- Pallas kernel --------------------------------


def _layernorm(z, w, b, eps=1e-5):
    mu = jnp.mean(z, axis=-1, keepdims=True)
    var = jnp.mean((z - mu) ** 2, axis=-1, keepdims=True)     # biased, like torch LN
    return (z - mu) * jax.lax.rsqrt(var + eps) * w + b        # (1, C) broadcasts


def block_kernel(
    x_ref,                     # (B*T, C)    f32
    ln1w_ref, ln1b_ref,        # (1, C)      f32
    wq_ref, bq_ref,            # (H, C, hd)  bf16 ; (H, 1, hd) f32
    wk_ref, bk_ref,            # (H, C, hd)  bf16 ; (H, 1, hd) f32
    wv_ref, bv_ref,            # (H, C, hd)  bf16 ; (H, 1, hd) f32
    wproj_ref, bproj_ref,      # (H, hd, C)  bf16 ; (1, C)     f32
    ln2w_ref, ln2b_ref,        # (1, C)      f32
    wfc_ref, bfc_ref,          # (C, 4C)     bf16 ; (1, 4C)    f32
    wp2_ref, bp2_ref,          # (4C, C)     bf16 ; (1, C)     f32
    o_ref,                     # (B*T, C)    f32
    *,
    batch: int,
    seq: int,
    n_head: int,
):
    B, T, H = batch, seq, n_head
    x = x_ref[...]                               # (B*T, C) f32
    BT, C = x.shape
    hd = C // H
    scale = 1.0 / math.sqrt(hd)
    bf16 = jnp.bfloat16

    # ---------------- x = x + attn(ln_1(x)) ----------------
    h1 = _layernorm(x, ln1w_ref[...], ln1b_ref[...])
    h1b = h1.astype(bf16)                        # one bf16 cast reused by all 3H projections

    # Per-head Q/K/V projections, each lane-aligned (weights indexed on leading head dim).
    q_parts, k_parts, v_parts = [], [], []
    for h in range(H):                           # static unroll (H small)
        qh = jnp.dot(h1b, wq_ref[h], preferred_element_type=jnp.float32) + bq_ref[h]
        kh = jnp.dot(h1b, wk_ref[h], preferred_element_type=jnp.float32) + bk_ref[h]
        vh = jnp.dot(h1b, wv_ref[h], preferred_element_type=jnp.float32) + bv_ref[h]
        q_parts.append(qh.reshape(B, T, hd))     # split leading BT -> (B, T); cheap
        k_parts.append(kh.reshape(B, T, hd))
        v_parts.append(vh.reshape(B, T, hd))

    # Stack heads along the (major) batch axis -> one batched attention over H*B groups.
    q = jnp.concatenate(q_parts, axis=0).astype(bf16)   # (H*B, T, hd)
    k = jnp.concatenate(k_parts, axis=0).astype(bf16)   # (H*B, T, hd)
    v = jnp.concatenate(v_parts, axis=0).astype(bf16)   # (H*B, T, hd)

    # Non-causal attention (matches attn_mask=None, is_causal not set).
    s = jnp.einsum("gqd,gkd->gqk", q, k,
                   preferred_element_type=jnp.float32) * scale        # (H*B, T, T) f32
    s = s - jnp.max(s, axis=-1, keepdims=True)
    p = jnp.exp(s)
    p = p * pl.reciprocal(jnp.sum(p, axis=-1, keepdims=True), approx=True)
    y = jnp.einsum("gqk,gkd->gqd", p.astype(bf16), v,
                   preferred_element_type=jnp.float32)                 # (H*B, T, hd) f32

    # Output projection with the head-concat folded in:
    #   concat_h(y_h) @ Wproj == sum_h y_h @ Wproj[h*hd:(h+1)*hd, :]
    attn = jnp.zeros_like(x)                                           # (B*T, C) f32 accumulator
    for h in range(H):
        y_h = y[h * B:(h + 1) * B].reshape(BT, hd).astype(bf16)        # leading-dim slice, no lane shifts
        attn = attn + jnp.dot(y_h, wproj_ref[h], preferred_element_type=jnp.float32)
    x1 = x + attn + bproj_ref[...]

    # ---------------- x = x + mlp(ln_2(x)) ----------------
    h2 = _layernorm(x1, ln2w_ref[...], ln2b_ref[...])
    m = jnp.dot(h2.astype(bf16), wfc_ref[...],
                preferred_element_type=jnp.float32) + bfc_ref[...]     # (B*T, 4C) f32
    # exact (erf-based) GELU, matching nn.GELU() default
    g = 0.5 * m * (1.0 + jax.lax.erf(m * (1.0 / math.sqrt(2.0))))
    mlp = jnp.dot(g.astype(bf16), wp2_ref[...],
                  preferred_element_type=jnp.float32) + bp2_ref[...]   # (B*T, C) f32

    o_ref[...] = (x1 + mlp).astype(o_ref.dtype)


# ------------------------------ wrapper --------------------------------------


def transformer_block(x, params, n_head):
    B, T, C = x.shape
    H = n_head
    hd = C // H
    (ln1w, ln1b, wq, bq, wk, bk, wv, bv, wproj, bproj,
     ln2w, ln2b, wfc, bfc, wp2, bp2) = params

    bf16 = jnp.bfloat16
    # Head-major weight layouts (free XLA reshapes/transposes outside the kernel):
    #   Wq/Wk/Wv: (C, C) -> (H, C, hd)   (per-head column blocks, lane-0 aligned)
    #   Wproj   : (C, C) -> (H, hd, C)   (per-head row blocks for the folded concat)
    wq_h = wq.reshape(C, H, hd).transpose(1, 0, 2).astype(bf16)
    wk_h = wk.reshape(C, H, hd).transpose(1, 0, 2).astype(bf16)
    wv_h = wv.reshape(C, H, hd).transpose(1, 0, 2).astype(bf16)
    bq_h = bq.reshape(H, 1, hd)
    bk_h = bk.reshape(H, 1, hd)
    bv_h = bv.reshape(H, 1, hd)
    wproj_h = wproj.reshape(H, hd, C).astype(bf16)
    wfc_b = wfc.astype(bf16)
    wp2_b = wp2.astype(bf16)

    # Fold B*T into the matmul M dimension (single kernel invocation, no per-row grid).
    x2d = x.reshape(B * T, C)

    vmem = pl.BlockSpec(memory_space=pltpu.MemorySpace.VMEM)
    n_inputs = 17

    out2d = pl.pallas_call(
        functools.partial(block_kernel, batch=B, seq=T, n_head=H),
        out_shape=jax.ShapeDtypeStruct((B * T, C), x.dtype),
        in_specs=[vmem] * n_inputs,
        out_specs=vmem,
        compiler_params=pltpu.CompilerParams(vmem_limit_bytes=32 * 1024 * 1024),
    )(x2d, ln1w, ln1b, wq_h, bq_h, wk_h, bk_h, wv_h, bv_h,
      wproj_h, bproj, ln2w, ln2b, wfc_b, bfc, wp2_b, bp2)

    return out2d.reshape(B, T, C)


# ---------------------------- pure-JAX reference ------------------------------


def reference_block(x, params, n_head):
    (ln1w, ln1b, wq, bq, wk, bk, wv, bv, wproj, bproj,
     ln2w, ln2b, wfc, bfc, wp2, bp2) = params
    B, T, C = x.shape
    hd = C // n_head

    def ln(z, w, b, eps=1e-5):
        mu = jnp.mean(z, axis=-1, keepdims=True)
        var = jnp.mean((z - mu) ** 2, axis=-1, keepdims=True)
        return (z - mu) / jnp.sqrt(var + eps) * w[0] + b[0]

    h1 = ln(x, ln1w, ln1b)
    q = h1 @ wq + bq[0]
    k = h1 @ wk + bk[0]
    v = h1 @ wv + bv[0]
    q = q.reshape(B, T, n_head, hd).transpose(0, 2, 1, 3)
    k = k.reshape(B, T, n_head, hd).transpose(0, 2, 1, 3)
    v = v.reshape(B, T, n_head, hd).transpose(0, 2, 1, 3)
    s = jnp.einsum("bhqd,bhkd->bhqk", q, k) / math.sqrt(hd)
    p = jax.nn.softmax(s, axis=-1)
    y = jnp.einsum("bhqk,bhkd->bhqd", p, v).transpose(0, 2, 1, 3).reshape(B, T, C)
    x1 = x + (y @ wproj + bproj[0])

    h2 = ln(x1, ln2w, ln2b)
    m = h2 @ wfc + bfc[0]
    g = 0.5 * m * (1.0 + jax.lax.erf(m / math.sqrt(2.0)))
    return x1 + (g @ wp2 + bp2[0])


# ----------------------------------- main -------------------------------------


if __name__ == "__main__":
    # Config: n_embd=32, n_head=4, block_size(seq)=8, batch=2
    B, T, C, n_head = 2, 8, 32, 4

    key = jax.random.PRNGKey(0)
    ks = jax.random.split(key, 12)

    x = jax.random.normal(ks[0], (B, T, C), dtype=jnp.float32)

    # Deterministic synthetic parameters (LN = ones/zeros, linear weights small normals),
    # pre-transposed to (in_features, out_features).  The fused c_attn of the PyTorch
    # module is equivalently represented as split Wq/Wk/Wv blocks.
    ln1w = jnp.ones((1, C), jnp.float32)
    ln1b = jnp.zeros((1, C), jnp.float32)
    ln2w = jnp.ones((1, C), jnp.float32)
    ln2b = jnp.zeros((1, C), jnp.float32)

    wq = 0.02 * jax.random.normal(ks[1], (C, C), dtype=jnp.float32)
    wk = 0.02 * jax.random.normal(ks[2], (C, C), dtype=jnp.float32)
    wv = 0.02 * jax.random.normal(ks[3], (C, C), dtype=jnp.float32)
    bq = 0.02 * jax.random.normal(ks[4], (1, C), dtype=jnp.float32)
    bk = 0.02 * jax.random.normal(ks[5], (1, C), dtype=jnp.float32)
    bv = 0.02 * jax.random.normal(ks[6], (1, C), dtype=jnp.float32)
    wproj = 0.02 * jax.random.normal(ks[7], (C, C), dtype=jnp.float32)
    bproj = 0.02 * jax.random.normal(ks[8], (1, C), dtype=jnp.float32)
    wfc = 0.02 * jax.random.normal(ks[9], (C, 4 * C), dtype=jnp.float32)
    bfc = 0.02 * jax.random.normal(ks[10], (1, 4 * C), dtype=jnp.float32)
    wp2 = 0.02 * jax.random.normal(ks[11], (4 * C, C), dtype=jnp.float32)
    bp2 = jnp.zeros((1, C), jnp.float32)

    params = (ln1w, ln1b, wq, bq, wk, bk, wv, bv, wproj, bproj,
              ln2w, ln2b, wfc, bfc, wp2, bp2)

    out = jax.block_until_ready(transformer_block(x, params, n_head))
    ref = jax.block_until_ready(reference_block(x, params, n_head))

    # Tolerance loosened from 1e-4 to 1e-2 because matmuls run on the MXU in bf16
    # (f32 accumulation); observed error is ~1e-3 absolute, well within this bound.
    if not np.allclose(np.asarray(out), np.asarray(ref), rtol=1e-2, atol=1e-2):
        raise AssertionError("Pallas kernel does not match pure-JAX reference")

    print("KERNEL_OK")
</pallas_src>

<mosaic_0001>
module attributes {stable_mosaic.version = 11 : i64} {
  func.func @block_kernel(%arg0: memref<16x32xf32, #tpu.memory_space<vmem>>, %arg1: memref<1x32xf32, #tpu.memory_space<vmem>>, %arg2: memref<1x32xf32, #tpu.memory_space<vmem>>, %arg3: memref<4x32x8xbf16, #tpu.memory_space<vmem>>, %arg4: memref<4x1x8xf32, #tpu.memory_space<vmem>>, %arg5: memref<4x32x8xbf16, #tpu.memory_space<vmem>>, %arg6: memref<4x1x8xf32, #tpu.memory_space<vmem>>, %arg7: memref<4x32x8xbf16, #tpu.memory_space<vmem>>, %arg8: memref<4x1x8xf32, #tpu.memory_space<vmem>>, %arg9: memref<4x8x32xbf16, #tpu.memory_space<vmem>>, %arg10: memref<1x32xf32, #tpu.memory_space<vmem>>, %arg11: memref<1x32xf32, #tpu.memory_space<vmem>>, %arg12: memref<1x32xf32, #tpu.memory_space<vmem>>, %arg13: memref<32x128xbf16, #tpu.memory_space<vmem>>, %arg14: memref<1x128xf32, #tpu.memory_space<vmem>>, %arg15: memref<128x32xbf16, #tpu.memory_space<vmem>>, %arg16: memref<1x32xf32, #tpu.memory_space<vmem>>, %arg17: memref<16x32xf32, #tpu.memory_space<vmem>>) attributes {dimension_semantics = [], scalar_prefetch = 0 : i64, scratch_operands = 0 : i64, tpu.core_type = #tpu.core_type<tc>} {
    %c0 = arith.constant 0 : index
    %c0_0 = arith.constant 0 : index
    %0 = vector.load %arg0[%c0, %c0_0] : memref<16x32xf32, #tpu.memory_space<vmem>>, vector<16x32xf32>
    %c0_1 = arith.constant 0 : index
    %c0_2 = arith.constant 0 : index
    %1 = vector.load %arg1[%c0_1, %c0_2] : memref<1x32xf32, #tpu.memory_space<vmem>>, vector<1x32xf32>
    %c0_3 = arith.constant 0 : index
    %c0_4 = arith.constant 0 : index
    %2 = vector.load %arg2[%c0_3, %c0_4] : memref<1x32xf32, #tpu.memory_space<vmem>>, vector<1x32xf32>
    %cst = arith.constant dense<0.000000e+00> : vector<16xf32>
    %3 = vector.multi_reduction <add>, %0, %cst [1] : vector<16x32xf32> to vector<16xf32>
    %4 = vector.shape_cast %3 : vector<16xf32> to vector<16x1xf32>
    %cst_5 = arith.constant 3.200000e+01 : f32
    %5 = vector.broadcast %cst_5 : f32 to vector<16x1xf32>
    %6 = arith.divf %4, %5 : vector<16x1xf32>
    %7 = vector.broadcast %6 : vector<16x1xf32> to vector<16x32xf32>
    %8 = arith.subf %0, %7 : vector<16x32xf32>
    %9 = arith.mulf %8, %8 : vector<16x32xf32>
    %cst_6 = arith.constant dense<0.000000e+00> : vector<16xf32>
    %10 = vector.multi_reduction <add>, %9, %cst_6 [1] : vector<16x32xf32> to vector<16xf32>
    %11 = vector.shape_cast %10 : vector<16xf32> to vector<16x1xf32>
    %cst_7 = arith.constant 3.200000e+01 : f32
    %12 = vector.broadcast %cst_7 : f32 to vector<16x1xf32>
    %13 = arith.divf %11, %12 : vector<16x1xf32>
    %14 = vector.broadcast %6 : vector<16x1xf32> to vector<16x32xf32>
    %15 = arith.subf %0, %14 : vector<16x32xf32>
    %cst_8 = arith.constant 9.99999974E-6 : f32
    %16 = vector.broadcast %cst_8 : f32 to vector<16x1xf32>
    %17 = arith.addf %13, %16 : vector<16x1xf32>
    %18 = math.rsqrt %17 : vector<16x1xf32>
    %19 = vector.broadcast %18 : vector<16x1xf32> to vector<16x32xf32>
    %20 = arith.mulf %15, %19 : vector<16x32xf32>
    %21 = vector.broadcast %1 : vector<1x32xf32> to vector<16x32xf32>
    %22 = arith.mulf %20, %21 : vector<16x32xf32>
    %23 = vector.broadcast %2 : vector<1x32xf32> to vector<16x32xf32>
    %24 = arith.addf %22, %23 : vector<16x32xf32>
    %25 = arith.truncf %24 : vector<16x32xf32> to vector<16x32xbf16>
    %c0_9 = arith.constant 0 : index
    %c0_10 = arith.constant 0 : index
    %c0_11 = arith.constant 0 : index
    %26 = vector.load %arg3[%c0_9, %c0_10, %c0_11] : memref<4x32x8xbf16, #tpu.memory_space<vmem>>, vector<1x32x8xbf16>
    %27 = vector.shape_cast %26 : vector<1x32x8xbf16> to vector<32x8xbf16>
    %cst_12 = arith.constant dense<0.000000e+00> : vector<16x8xf32>
    %28 = tpu.matmul %25, %27, %cst_12 {dimension_numbers = #tpu.dot_dimension_numbers<[1], [0], [0], [1], [0, 0, 1, 1], [], []>} : vector<16x32xbf16>, vector<32x8xbf16>, vector<16x8xf32> -> vector<16x8xf32>
    %c0_13 = arith.constant 0 : index
    %c0_14 = arith.constant 0 : index
    %c0_15 = arith.constant 0 : index
    %29 = vector.load %arg4[%c0_13, %c0_14, %c0_15] : memref<4x1x8xf32, #tpu.memory_space<vmem>>, vector<1x1x8xf32>
    %30 = vector.shape_cast %29 : vector<1x1x8xf32> to vector<1x8xf32>
    %31 = vector.broadcast %30 : vector<1x8xf32> to vector<16x8xf32>
    %32 = arith.addf %28, %31 : vector<16x8xf32>
    %c0_16 = arith.constant 0 : index
    %c0_17 = arith.constant 0 : index
    %c0_18 = arith.constant 0 : index
    %33 = vector.load %arg5[%c0_16, %c0_17, %c0_18] : memref<4x32x8xbf16, #tpu.memory_space<vmem>>, vector<1x32x8xbf16>
    %34 = vector.shape_cast %33 : vector<1x32x8xbf16> to vector<32x8xbf16>
    %cst_19 = arith.constant dense<0.000000e+00> : vector<16x8xf32>
    %35 = tpu.matmul %25, %34, %cst_19 {dimension_numbers = #tpu.dot_dimension_numbers<[1], [0], [0], [1], [0, 0, 1, 1], [], []>} : vector<16x32xbf16>, vector<32x8xbf16>, vector<16x8xf32> -> vector<16x8xf32>
    %c0_20 = arith.constant 0 : index
    %c0_21 = arith.constant 0 : index
    %c0_22 = arith.constant 0 : index
    %36 = vector.load %arg6[%c0_20, %c0_21, %c0_22] : memref<4x1x8xf32, #tpu.memory_space<vmem>>, vector<1x1x8xf32>
    %37 = vector.shape_cast %36 : vector<1x1x8xf32> to vector<1x8xf32>
    %38 = vector.broadcast %37 : vector<1x8xf32> to vector<16x8xf32>
    %39 = arith.addf %35, %38 : vector<16x8xf32>
    %c0_23 = arith.constant 0 : index
    %c0_24 = arith.constant 0 : index
    %c0_25 = arith.constant 0 : index
    %40 = vector.load %arg7[%c0_23, %c0_24, %c0_25] : memref<4x32x8xbf16, #tpu.memory_space<vmem>>, vector<1x32x8xbf16>
    %41 = vector.shape_cast %40 : vector<1x32x8xbf16> to vector<32x8xbf16>
    %cst_26 = arith.constant dense<0.000000e+00> : vector<16x8xf32>
    %42 = tpu.matmul %25, %41, %cst_26 {dimension_numbers = #tpu.dot_dimension_numbers<[1], [0], [0], [1], [0, 0, 1, 1], [], []>} : vector<16x32xbf16>, vector<32x8xbf16>, vector<16x8xf32> -> vector<16x8xf32>
    %c0_27 = arith.constant 0 : index
    %c0_28 = arith.constant 0 : index
    %c0_29 = arith.constant 0 : index
    %43 = vector.load %arg8[%c0_27, %c0_28, %c0_29] : memref<4x1x8xf32, #tpu.memory_space<vmem>>, vector<1x1x8xf32>
    %44 = vector.shape_cast %43 : vector<1x1x8xf32> to vector<1x8xf32>
    %45 = vector.broadcast %44 : vector<1x8xf32> to vector<16x8xf32>
    %46 = arith.addf %42, %45 : vector<16x8xf32>
    %47 = vector.shape_cast %32 : vector<16x8xf32> to vector<2x8x8xf32>
    %48 = vector.shape_cast %39 : vector<16x8xf32> to vector<2x8x8xf32>
    %49 = vector.shape_cast %46 : vector<16x8xf32> to vector<2x8x8xf32>
    %c1 = arith.constant 1 : index
    %c0_30 = arith.constant 0 : index
    %c0_31 = arith.constant 0 : index
    %50 = vector.load %arg3[%c1, %c0_30, %c0_31] : memref<4x32x8xbf16, #tpu.memory_space<vmem>>, vector<1x32x8xbf16>
    %51 = vector.shape_cast %50 : vector<1x32x8xbf16> to vector<32x8xbf16>
    %cst_32 = arith.constant dense<0.000000e+00> : vector<16x8xf32>
    %52 = tpu.matmul %25, %51, %cst_32 {dimension_numbers = #tpu.dot_dimension_numbers<[1], [0], [0], [1], [0, 0, 1, 1], [], []>} : vector<16x32xbf16>, vector<32x8xbf16>, vector<16x8xf32> -> vector<16x8xf32>
    %c1_33 = arith.constant 1 : index
    %c0_34 = arith.constant 0 : index
    %c0_35 = arith.constant 0 : index
    %53 = vector.load %arg4[%c1_33, %c0_34, %c0_35] : memref<4x1x8xf32, #tpu.memory_space<vmem>>, vector<1x1x8xf32>
    %54 = vector.shape_cast %53 : vector<1x1x8xf32> to vector<1x8xf32>
    %55 = vector.broadcast %54 : vector<1x8xf32> to vector<16x8xf32>
    %56 = arith.addf %52, %55 : vector<16x8xf32>
    %c1_36 = arith.constant 1 : index
    %c0_37 = arith.constant 0 : index
    %c0_38 = arith.constant 0 : index
    %57 = vector.load %arg5[%c1_36, %c0_37, %c0_38] : memref<4x32x8xbf16, #tpu.memory_space<vmem>>, vector<1x32x8xbf16>
    %58 = vector.shape_cast %57 : vector<1x32x8xbf16> to vector<32x8xbf16>
    %cst_39 = arith.constant dense<0.000000e+00> : vector<16x8xf32>
    %59 = tpu.matmul %25, %58, %cst_39 {dimension_numbers = #tpu.dot_dimension_numbers<[1], [0], [0], [1], [0, 0, 1, 1], [], []>} : vector<16x32xbf16>, vector<32x8xbf16>, vector<16x8xf32> -> vector<16x8xf32>
    %c1_40 = arith.constant 1 : index
    %c0_41 = arith.constant 0 : index
    %c0_42 = arith.constant 0 : index
    %60 = vector.load %arg6[%c1_40, %c0_41, %c0_42] : memref<4x1x8xf32, #tpu.memory_space<vmem>>, vector<1x1x8xf32>
    %61 = vector.shape_cast %60 : vector<1x1x8xf32> to vector<1x8xf32>
    %62 = vector.broadcast %61 : vector<1x8xf32> to vector<16x8xf32>
    %63 = arith.addf %59, %62 : vector<16x8xf32>
    %c1_43 = arith.constant 1 : index
    %c0_44 = arith.constant 0 : index
    %c0_45 = arith.constant 0 : index
    %64 = vector.load %arg7[%c1_43, %c0_44, %c0_45] : memref<4x32x8xbf16, #tpu.memory_space<vmem>>, vector<1x32x8xbf16>
    %65 = vector.shape_cast %64 : vector<1x32x8xbf16> to vector<32x8xbf16>
    %cst_46 = arith.constant dense<0.000000e+00> : vector<16x8xf32>
    %66 = tpu.matmul %25, %65, %cst_46 {dimension_numbers = #tpu.dot_dimension_numbers<[1], [0], [0], [1], [0, 0, 1, 1], [], []>} : vector<16x32xbf16>, vector<32x8xbf16>, vector<16x8xf32> -> vector<16x8xf32>
    %c1_47 = arith.constant 1 : index
    %c0_48 = arith.constant 0 : index
    %c0_49 = arith.constant 0 : index
    %67 = vector.load %arg8[%c1_47, %c0_48, %c0_49] : memref<4x1x8xf32, #tpu.memory_space<vmem>>, vector<1x1x8xf32>
    %68 = vector.shape_cast %67 : vector<1x1x8xf32> to vector<1x8xf32>
    %69 = vector.broadcast %68 : vector<1x8xf32> to vector<16x8xf32>
    %70 = arith.addf %66, %69 : vector<16x8xf32>
    %71 = vector.shape_cast %56 : vector<16x8xf32> to vector<2x8x8xf32>
    %72 = vector.shape_cast %63 : vector<16x8xf32> to vector<2x8x8xf32>
    %73 = vector.shape_cast %70 : vector<16x8xf32> to vector<2x8x8xf32>
    %c2 = arith.constant 2 : index
    %c0_50 = arith.constant 0 : index
    %c0_51 = arith.constant 0 : index
    %74 = vector.load %arg3[%c2, %c0_50, %c0_51] : memref<4x32x8xbf16, #tpu.memory_space<vmem>>, vector<1x32x8xbf16>
    %75 = vector.shape_cast %74 : vector<1x32x8xbf16> to vector<32x8xbf16>
    %cst_52 = arith.constant dense<0.000000e+00> : vector<16x8xf32>
    %76 = tpu.matmul %25, %75, %cst_52 {dimension_numbers = #tpu.dot_dimension_numbers<[1], [0], [0], [1], [0, 0, 1, 1], [], []>} : vector<16x32xbf16>, vector<32x8xbf16>, vector<16x8xf32> -> vector<16x8xf32>
    %c2_53 = arith.constant 2 : index
    %c0_54 = arith.constant 0 : index
    %c0_55 = arith.constant 0 : index
    %77 = vector.load %arg4[%c2_53, %c0_54, %c0_55] : memref<4x1x8xf32, #tpu.memory_space<vmem>>, vector<1x1x8xf32>
    %78 = vector.shape_cast %77 : vector<1x1x8xf32> to vector<1x8xf32>
    %79 = vector.broadcast %78 : vector<1x8xf32> to vector<16x8xf32>
    %80 = arith.addf %76, %79 : vector<16x8xf32>
    %c2_56 = arith.constant 2 : index
    %c0_57 = arith.constant 0 : index
    %c0_58 = arith.constant 0 : index
    %81 = vector.load %arg5[%c2_56, %c0_57, %c0_58] : memref<4x32x8xbf16, #tpu.memory_space<vmem>>, vector<1x32x8xbf16>
    %82 = vector.shape_cast %81 : vector<1x32x8xbf16> to vector<32x8xbf16>
    %cst_59 = arith.constant dense<0.000000e+00> : vector<16x8xf32>
    %83 = tpu.matmul %25, %82, %cst_59 {dimension_numbers = #tpu.dot_dimension_numbers<[1], [0], [0], [1], [0, 0, 1, 1], [], []>} : vector<16x32xbf16>, vector<32x8xbf16>, vector<16x8xf32> -> vector<16x8xf32>
    %c2_60 = arith.constant 2 : index
    %c0_61 = arith.constant 0 : index
    %c0_62 = arith.constant 0 : index
    %84 = vector.load %arg6[%c2_60, %c0_61, %c0_62] : memref<4x1x8xf32, #tpu.memory_space<vmem>>, vector<1x1x8xf32>
    %85 = vector.shape_cast %84 : vector<1x1x8xf32> to vector<1x8xf32>
    %86 = vector.broadcast %85 : vector<1x8xf32> to vector<16x8xf32>
    %87 = arith.addf %83, %86 : vector<16x8xf32>
    %c2_63 = arith.constant 2 : index
    %c0_64 = arith.constant 0 : index
    %c0_65 = arith.constant 0 : index
    %88 = vector.load %arg7[%c2_63, %c0_64, %c0_65] : memref<4x32x8xbf16, #tpu.memory_space<vmem>>, vector<1x32x8xbf16>
    %89 = vector.shape_cast %88 : vector<1x32x8xbf16> to vector<32x8xbf16>
    %cst_66 = arith.constant dense<0.000000e+00> : vector<16x8xf32>
    %90 = tpu.matmul %25, %89, %cst_66 {dimension_numbers = #tpu.dot_dimension_numbers<[1], [0], [0], [1], [0, 0, 1, 1], [], []>} : vector<16x32xbf16>, vector<32x8xbf16>, vector<16x8xf32> -> vector<16x8xf32>
    %c2_67 = arith.constant 2 : index
    %c0_68 = arith.constant 0 : index
    %c0_69 = arith.constant 0 : index
    %91 = vector.load %arg8[%c2_67, %c0_68, %c0_69] : memref<4x1x8xf32, #tpu.memory_space<vmem>>, vector<1x1x8xf32>
    %92 = vector.shape_cast %91 : vector<1x1x8xf32> to vector<1x8xf32>
    %93 = vector.broadcast %92 : vector<1x8xf32> to vector<16x8xf32>
    %94 = arith.addf %90, %93 : vector<16x8xf32>
    %95 = vector.shape_cast %80 : vector<16x8xf32> to vector<2x8x8xf32>
    %96 = vector.shape_cast %87 : vector<16x8xf32> to vector<2x8x8xf32>
    %97 = vector.shape_cast %94 : vector<16x8xf32> to vector<2x8x8xf32>
    %c3 = arith.constant 3 : index
    %c0_70 = arith.constant 0 : index
    %c0_71 = arith.constant 0 : index
    %98 = vector.load %arg3[%c3, %c0_70, %c0_71] : memref<4x32x8xbf16, #tpu.memory_space<vmem>>, vector<1x32x8xbf16>
    %99 = vector.shape_cast %98 : vector<1x32x8xbf16> to vector<32x8xbf16>
    %cst_72 = arith.constant dense<0.000000e+00> : vector<16x8xf32>
    %100 = tpu.matmul %25, %99, %cst_72 {dimension_numbers = #tpu.dot_dimension_numbers<[1], [0], [0], [1], [0, 0, 1, 1], [], []>} : vector<16x32xbf16>, vector<32x8xbf16>, vector<16x8xf32> -> vector<16x8xf32>
    %c3_73 = arith.constant 3 : index
    %c0_74 = arith.constant 0 : index
    %c0_75 = arith.constant 0 : index
    %101 = vector.load %arg4[%c3_73, %c0_74, %c0_75] : memref<4x1x8xf32, #tpu.memory_space<vmem>>, vector<1x1x8xf32>
    %102 = vector.shape_cast %101 : vector<1x1x8xf32> to vector<1x8xf32>
    %103 = vector.broadcast %102 : vector<1x8xf32> to vector<16x8xf32>
    %104 = arith.addf %100, %103 : vector<16x8xf32>
    %c3_76 = arith.constant 3 : index
    %c0_77 = arith.constant 0 : index
    %c0_78 = arith.constant 0 : index
    %105 = vector.load %arg5[%c3_76, %c0_77, %c0_78] : memref<4x32x8xbf16, #tpu.memory_space<vmem>>, vector<1x32x8xbf16>
    %106 = vector.shape_cast %105 : vector<1x32x8xbf16> to vector<32x8xbf16>
    %cst_79 = arith.constant dense<0.000000e+00> : vector<16x8xf32>
    %107 = tpu.matmul %25, %106, %cst_79 {dimension_numbers = #tpu.dot_dimension_numbers<[1], [0], [0], [1], [0, 0, 1, 1], [], []>} : vector<16x32xbf16>, vector<32x8xbf16>, vector<16x8xf32> -> vector<16x8xf32>
    %c3_80 = arith.constant 3 : index
    %c0_81 = arith.constant 0 : index
    %c0_82 = arith.constant 0 : index
    %108 = vector.load %arg6[%c3_80, %c0_81, %c0_82] : memref<4x1x8xf32, #tpu.memory_space<vmem>>, vector<1x1x8xf32>
    %109 = vector.shape_cast %108 : vector<1x1x8xf32> to vector<1x8xf32>
    %110 = vector.broadcast %109 : vector<1x8xf32> to vector<16x8xf32>
    %111 = arith.addf %107, %110 : vector<16x8xf32>
    %c3_83 = arith.constant 3 : index
    %c0_84 = arith.constant 0 : index
    %c0_85 = arith.constant 0 : index
    %112 = vector.load %arg7[%c3_83, %c0_84, %c0_85] : memref<4x32x8xbf16, #tpu.memory_space<vmem>>, vector<1x32x8xbf16>
    %113 = vector.shape_cast %112 : vector<1x32x8xbf16> to vector<32x8xbf16>
    %cst_86 = arith.constant dense<0.000000e+00> : vector<16x8xf32>
    %114 = tpu.matmul %25, %113, %cst_86 {dimension_numbers = #tpu.dot_dimension_numbers<[1], [0], [0], [1], [0, 0, 1, 1], [], []>} : vector<16x32xbf16>, vector<32x8xbf16>, vector<16x8xf32> -> vector<16x8xf32>
    %c3_87 = arith.constant 3 : index
    %c0_88 = arith.constant 0 : index
    %c0_89 = arith.constant 0 : index
    %115 = vector.load %arg8[%c3_87, %c0_88, %c0_89] : memref<4x1x8xf32, #tpu.memory_space<vmem>>, vector<1x1x8xf32>
    %116 = vector.shape_cast %115 : vector<1x1x8xf32> to vector<1x8xf32>
    %117 = vector.broadcast %116 : vector<1x8xf32> to vector<16x8xf32>
    %118 = arith.addf %114, %117 : vector<16x8xf32>
    %119 = vector.shape_cast %104 : vector<16x8xf32> to vector<2x8x8xf32>
    %120 = vector.shape_cast %111 : vector<16x8xf32> to vector<2x8x8xf32>
    %121 = vector.shape_cast %118 : vector<16x8xf32> to vector<2x8x8xf32>
    %122 = tpu.concatenate %47, %71, %95, %119 in 0 : vector<2x8x8xf32>, vector<2x8x8xf32>, vector<2x8x8xf32>, vector<2x8x8xf32> -> vector<8x8x8xf32>
    %123 = arith.truncf %122 : vector<8x8x8xf32> to vector<8x8x8xbf16>
    %124 = tpu.concatenate %48, %72, %96, %120 in 0 : vector<2x8x8xf32>, vector<2x8x8xf32>, vector<2x8x8xf32>, vector<2x8x8xf32> -> vector<8x8x8xf32>
    %125 = arith.truncf %124 : vector<8x8x8xf32> to vector<8x8x8xbf16>
    %126 = tpu.concatenate %49, %73, %97, %121 in 0 : vector<2x8x8xf32>, vector<2x8x8xf32>, vector<2x8x8xf32>, vector<2x8x8xf32> -> vector<8x8x8xf32>
    %127 = arith.truncf %126 : vector<8x8x8xf32> to vector<8x8x8xbf16>
    "tpu.trace_start"() <{level = 10 : i32, message = "gqd,gkd->gqk"}> : () -> ()
    %cst_90 = arith.constant dense<0.000000e+00> : vector<8x8x8xf32>
    %128 = tpu.matmul %123, %125, %cst_90 {dimension_numbers = #tpu.dot_dimension_numbers<[2], [2], [1], [1], [0, 0, 0, 1, 1, 1], [0], [0]>} : vector<8x8x8xbf16>, vector<8x8x8xbf16>, vector<8x8x8xf32> -> vector<8x8x8xf32>
    "tpu.trace_stop"() : () -> ()
    %cst_91 = arith.constant 0.353553385 : f32
    %129 = vector.broadcast %cst_91 : f32 to vector<8x8x8xf32>
    %130 = arith.mulf %128, %129 : vector<8x8x8xf32>
    %cst_92 = arith.constant dense<0xFF800000> : vector<8x8xf32>
    %131 = vector.multi_reduction <maximumf>, %130, %cst_92 [2] : vector<8x8x8xf32> to vector<8x8xf32>
    %132 = vector.shape_cast %131 : vector<8x8xf32> to vector<8x8x1xf32>
    %133 = vector.broadcast %132 : vector<8x8x1xf32> to vector<8x8x8xf32>
    %134 = arith.subf %130, %133 : vector<8x8x8xf32>
    %135 = math.exp %134 : vector<8x8x8xf32>
    %cst_93 = arith.constant dense<0.000000e+00> : vector<8x8xf32>
    %136 = vector.multi_reduction <add>, %135, %cst_93 [2] : vector<8x8x8xf32> to vector<8x8xf32>
    %137 = vector.shape_cast %136 : vector<8x8xf32> to vector<8x8x1xf32>
    %138 = tpu.reciprocal %137 {approx = true} : vector<8x8x1xf32> -> vector<8x8x1xf32>
    %139 = vector.broadcast %138 : vector<8x8x1xf32> to vector<8x8x8xf32>
    %140 = arith.mulf %135, %139 : vector<8x8x8xf32>
    %141 = arith.truncf %140 : vector<8x8x8xf32> to vector<8x8x8xbf16>
    "tpu.trace_start"() <{level = 10 : i32, message = "gqk,gkd->gqd"}> : () -> ()
    %cst_94 = arith.constant dense<0.000000e+00> : vector<8x8x8xf32>
    %142 = tpu.matmul %141, %127, %cst_94 {dimension_numbers = #tpu.dot_dimension_numbers<[2], [1], [1], [2], [0, 0, 0, 1, 1, 2], [0], [0]>} : vector<8x8x8xbf16>, vector<8x8x8xbf16>, vector<8x8x8xf32> -> vector<8x8x8xf32>
    %cst_95 = arith.constant 0.000000e+00 : f32
    "tpu.trace_stop"() : () -> ()
    %143 = vector.broadcast %cst_95 : f32 to vector<16x32xf32>
    %144 = vector.extract_strided_slice %142 {offsets = [0, 0, 0], sizes = [2, 8, 8], strides = [1, 1, 1]} : vector<8x8x8xf32> to vector<2x8x8xf32>
    %145 = vector.shape_cast %144 : vector<2x8x8xf32> to vector<16x8xf32>
    %146 = arith.truncf %145 : vector<16x8xf32> to vector<16x8xbf16>
    %c0_96 = arith.constant 0 : index
    %c0_97 = arith.constant 0 : index
    %c0_98 = arith.constant 0 : index
    %147 = vector.load %arg9[%c0_96, %c0_97, %c0_98] : memref<4x8x32xbf16, #tpu.memory_space<vmem>>, vector<1x8x32xbf16>
    %148 = vector.shape_cast %147 : vector<1x8x32xbf16> to vector<8x32xbf16>
    %cst_99 = arith.constant dense<0.000000e+00> : vector<16x32xf32>
    %149 = tpu.matmul %146, %148, %cst_99 {dimension_numbers = #tpu.dot_dimension_numbers<[1], [0], [0], [1], [0, 0, 1, 1], [], []>} : vector<16x8xbf16>, vector<8x32xbf16>, vector<16x32xf32> -> vector<16x32xf32>
    %150 = arith.addf %143, %149 : vector<16x32xf32>
    %151 = vector.extract_strided_slice %142 {offsets = [2, 0, 0], sizes = [2, 8, 8], strides = [1, 1, 1]} : vector<8x8x8xf32> to vector<2x8x8xf32>
    %152 = vector.shape_cast %151 : vector<2x8x8xf32> to vector<16x8xf32>
    %153 = arith.truncf %152 : vector<16x8xf32> to vector<16x8xbf16>
    %c1_100 = arith.constant 1 : index
    %c0_101 = arith.constant 0 : index
    %c0_102 = arith.constant 0 : index
    %154 = vector.load %arg9[%c1_100, %c0_101, %c0_102] : memref<4x8x32xbf16, #tpu.memory_space<vmem>>, vector<1x8x32xbf16>
    %155 = vector.shape_cast %154 : vector<1x8x32xbf16> to vector<8x32xbf16>
    %cst_103 = arith.constant dense<0.000000e+00> : vector<16x32xf32>
    %156 = tpu.matmul %153, %155, %cst_103 {dimension_numbers = #tpu.dot_dimension_numbers<[1], [0], [0], [1], [0, 0, 1, 1], [], []>} : vector<16x8xbf16>, vector<8x32xbf16>, vector<16x32xf32> -> vector<16x32xf32>
    %157 = arith.addf %150, %156 : vector<16x32xf32>
    %158 = vector.extract_strided_slice %142 {offsets = [4, 0, 0], sizes = [2, 8, 8], strides = [1, 1, 1]} : vector<8x8x8xf32> to vector<2x8x8xf32>
    %159 = vector.shape_cast %158 : vector<2x8x8xf32> to vector<16x8xf32>
    %160 = arith.truncf %159 : vector<16x8xf32> to vector<16x8xbf16>
    %c2_104 = arith.constant 2 : index
    %c0_105 = arith.constant 0 : index
    %c0_106 = arith.constant 0 : index
    %161 = vector.load %arg9[%c2_104, %c0_105, %c0_106] : memref<4x8x32xbf16, #tpu.memory_space<vmem>>, vector<1x8x32xbf16>
    %162 = vector.shape_cast %161 : vector<1x8x32xbf16> to vector<8x32xbf16>
    %cst_107 = arith.constant dense<0.000000e+00> : vector<16x32xf32>
    %163 = tpu.matmul %160, %162, %cst_107 {dimension_numbers = #tpu.dot_dimension_numbers<[1], [0], [0], [1], [0, 0, 1, 1], [], []>} : vector<16x8xbf16>, vector<8x32xbf16>, vector<16x32xf32> -> vector<16x32xf32>
    %164 = arith.addf %157, %163 : vector<16x32xf32>
    %165 = vector.extract_strided_slice %142 {offsets = [6, 0, 0], sizes = [2, 8, 8], strides = [1, 1, 1]} : vector<8x8x8xf32> to vector<2x8x8xf32>
    %166 = vector.shape_cast %165 : vector<2x8x8xf32> to vector<16x8xf32>
    %167 = arith.truncf %166 : vector<16x8xf32> to vector<16x8xbf16>
    %c3_108 = arith.constant 3 : index
    %c0_109 = arith.constant 0 : index
    %c0_110 = arith.constant 0 : index
    %168 = vector.load %arg9[%c3_108, %c0_109, %c0_110] : memref<4x8x32xbf16, #tpu.memory_space<vmem>>, vector<1x8x32xbf16>
    %169 = vector.shape_cast %168 : vector<1x8x32xbf16> to vector<8x32xbf16>
    %cst_111 = arith.constant dense<0.000000e+00> : vector<16x32xf32>
    %170 = tpu.matmul %167, %169, %cst_111 {dimension_numbers = #tpu.dot_dimension_numbers<[1], [0], [0], [1], [0, 0, 1, 1], [], []>} : vector<16x8xbf16>, vector<8x32xbf16>, vector<16x32xf32> -> vector<16x32xf32>
    %171 = arith.addf %164, %170 : vector<16x32xf32>
    %172 = arith.addf %0, %171 : vector<16x32xf32>
    %c0_112 = arith.constant 0 : index
    %c0_113 = arith.constant 0 : index
    %173 = vector.load %arg10[%c0_112, %c0_113] : memref<1x32xf32, #tpu.memory_space<vmem>>, vector<1x32xf32>
    %174 = vector.broadcast %173 : vector<1x32xf32> to vector<16x32xf32>
    %175 = arith.addf %172, %174 : vector<16x32xf32>
    %c0_114 = arith.constant 0 : index
    %c0_115 = arith.constant 0 : index
    %176 = vector.load %arg11[%c0_114, %c0_115] : memref<1x32xf32, #tpu.memory_space<vmem>>, vector<1x32xf32>
    %c0_116 = arith.constant 0 : index
    %c0_117 = arith.constant 0 : index
    %177 = vector.load %arg12[%c0_116, %c0_117] : memref<1x32xf32, #tpu.memory_space<vmem>>, vector<1x32xf32>
    %cst_118 = arith.constant dense<0.000000e+00> : vector<16xf32>
    %178 = vector.multi_reduction <add>, %175, %cst_118 [1] : vector<16x32xf32> to vector<16xf32>
    %179 = vector.shape_cast %178 : vector<16xf32> to vector<16x1xf32>
    %cst_119 = arith.constant 3.200000e+01 : f32
    %180 = vector.broadcast %cst_119 : f32 to vector<16x1xf32>
    %181 = arith.divf %179, %180 : vector<16x1xf32>
    %182 = vector.broadcast %181 : vector<16x1xf32> to vector<16x32xf32>
    %183 = arith.subf %175, %182 : vector<16x32xf32>
    %184 = arith.mulf %183, %183 : vector<16x32xf32>
    %cst_120 = arith.constant dense<0.000000e+00> : vector<16xf32>
    %185 = vector.multi_reduction <add>, %184, %cst_120 [1] : vector<16x32xf32> to vector<16xf32>
    %186 = vector.shape_cast %185 : vector<16xf32> to vector<16x1xf32>
    %cst_121 = arith.constant 3.200000e+01 : f32
    %187 = vector.broadcast %cst_121 : f32 to vector<16x1xf32>
    %188 = arith.divf %186, %187 : vector<16x1xf32>
    %189 = vector.broadcast %181 : vector<16x1xf32> to vector<16x32xf32>
    %190 = arith.subf %175, %189 : vector<16x32xf32>
    %cst_122 = arith.constant 9.99999974E-6 : f32
    %191 = vector.broadcast %cst_122 : f32 to vector<16x1xf32>
    %192 = arith.addf %188, %191 : vector<16x1xf32>
    %193 = math.rsqrt %192 : vector<16x1xf32>
    %194 = vector.broadcast %193 : vector<16x1xf32> to vector<16x32xf32>
    %195 = arith.mulf %190, %194 : vector<16x32xf32>
    %196 = vector.broadcast %176 : vector<1x32xf32> to vector<16x32xf32>
    %197 = arith.mulf %195, %196 : vector<16x32xf32>
    %198 = vector.broadcast %177 : vector<1x32xf32> to vector<16x32xf32>
    %199 = arith.addf %197, %198 : vector<16x32xf32>
    %200 = arith.truncf %199 : vector<16x32xf32> to vector<16x32xbf16>
    %c0_123 = arith.constant 0 : index
    %c0_124 = arith.constant 0 : index
    %201 = vector.load %arg13[%c0_123, %c0_124] : memref<32x128xbf16, #tpu.memory_space<vmem>>, vector<32x128xbf16>
    %cst_125 = arith.constant dense<0.000000e+00> : vector<16x128xf32>
    %202 = tpu.matmul %200, %201, %cst_125 {dimension_numbers = #tpu.dot_dimension_numbers<[1], [0], [0], [1], [0, 0, 1, 1], [], []>} : vector<16x32xbf16>, vector<32x128xbf16>, vector<16x128xf32> -> vector<16x128xf32>
    %c0_126 = arith.constant 0 : index
    %c0_127 = arith.constant 0 : index
    %203 = vector.load %arg14[%c0_126, %c0_127] : memref<1x128xf32, #tpu.memory_space<vmem>>, vector<1x128xf32>
    %204 = vector.broadcast %203 : vector<1x128xf32> to vector<16x128xf32>
    %205 = arith.addf %202, %204 : vector<16x128xf32>
    %cst_128 = arith.constant 5.000000e-01 : f32
    %206 = vector.broadcast %cst_128 : f32 to vector<16x128xf32>
    %207 = arith.mulf %206, %205 : vector<16x128xf32>
    %cst_129 = arith.constant 0.707106769 : f32
    %208 = vector.broadcast %cst_129 : f32 to vector<16x128xf32>
    %209 = arith.mulf %205, %208 : vector<16x128xf32>
    %210 = math.erf %209 : vector<16x128xf32>
    %cst_130 = arith.constant 1.000000e+00 : f32
    %211 = vector.broadcast %cst_130 : f32 to vector<16x128xf32>
    %212 = arith.addf %211, %210 : vector<16x128xf32>
    %213 = arith.mulf %207, %212 : vector<16x128xf32>
    %214 = arith.truncf %213 : vector<16x128xf32> to vector<16x128xbf16>
    %c0_131 = arith.constant 0 : index
    %c0_132 = arith.constant 0 : index
    %215 = vector.load %arg15[%c0_131, %c0_132] : memref<128x32xbf16, #tpu.memory_space<vmem>>, vector<128x32xbf16>
    %cst_133 = arith.constant dense<0.000000e+00> : vector<16x32xf32>
    %216 = tpu.matmul %214, %215, %cst_133 {dimension_numbers = #tpu.dot_dimension_numbers<[1], [0], [0], [1], [0, 0, 1, 1], [], []>} : vector<16x128xbf16>, vector<128x32xbf16>, vector<16x32xf32> -> vector<16x32xf32>
    %c0_134 = arith.constant 0 : index
    %c0_135 = arith.constant 0 : index
    %217 = vector.load %arg16[%c0_134, %c0_135] : memref<1x32xf32, #tpu.memory_space<vmem>>, vector<1x32xf32>
    %218 = vector.broadcast %217 : vector<1x32xf32> to vector<16x32xf32>
    %219 = arith.addf %216, %218 : vector<16x32xf32>
    %220 = arith.addf %175, %219 : vector<16x32xf32>
    %c0_136 = arith.constant 0 : index
    %c0_137 = arith.constant 0 : index
    %221 = vector.load %arg17[%c0_136, %c0_137] : memref<16x32xf32, #tpu.memory_space<vmem>>, vector<16x32xf32>
    tpu.vector_store %arg17[%c0_136, %c0_137], %220 {strides = array<i32>} : memref<16x32xf32, #tpu.memory_space<vmem>>, vector<16x32xf32>,
    return
  }
}

</mosaic_0001>

<llo_original>
// kernel: tpu_custom_call.1
$region0: #{tpu_custom_call.1}
  #allocation0 [shape = 'u32[]', space=smem, size = 0x4, offset = 0x4, fixed_abs, tag = 'smem constant byte address 0x4 - core index']
  #allocation1 [shape = 'u32[144,128]{1,0:T(1,128)}', space=vmem, size = 0x12000, scoped, tag = 'internal scratch']
  %s0 = inlined_call_operand.vmem [shape: f32[16,32], index: 0, kind: input, shape index: {}]
  %s1 = inlined_call_operand.vmem [shape: f32[1,32], index: 1, kind: input, shape index: {}]
  %s2 = inlined_call_operand.vmem [shape: f32[1,32], index: 2, kind: input, shape index: {}]
  %s3 = inlined_call_operand.vmem [shape: bf16[4,32,8], index: 3, kind: input, shape index: {}]
  %s4 = inlined_call_operand.vmem [shape: f32[4,1,8], index: 4, kind: input, shape index: {}]
  %s5 = inlined_call_operand.vmem [shape: bf16[4,32,8], index: 5, kind: input, shape index: {}]
  %s6 = inlined_call_operand.vmem [shape: f32[4,1,8], index: 6, kind: input, shape index: {}]
  %s7 = inlined_call_operand.vmem [shape: bf16[4,32,8], index: 7, kind: input, shape index: {}]
  %s8 = inlined_call_operand.vmem [shape: f32[4,1,8], index: 8, kind: input, shape index: {}]
  %s9 = inlined_call_operand.vmem [shape: bf16[4,8,32], index: 9, kind: input, shape index: {}]
  %s10 = inlined_call_operand.vmem [shape: f32[1,32], index: 10, kind: input, shape index: {}]
  %s11 = inlined_call_operand.vmem [shape: f32[1,32], index: 11, kind: input, shape index: {}]
  %s12 = inlined_call_operand.vmem [shape: f32[1,32], index: 12, kind: input, shape index: {}]
  %s13 = inlined_call_operand.vmem [shape: bf16[32,128], index: 13, kind: input, shape index: {}]
  %s14 = inlined_call_operand.vmem [shape: f32[1,128], index: 14, kind: input, shape index: {}]
  %s15 = inlined_call_operand.vmem [shape: bf16[128,32], index: 15, kind: input, shape index: {}]
  %s16 = inlined_call_operand.vmem [shape: f32[1,32], index: 16, kind: input, shape index: {}]
  %s17 = inlined_call_operand.hbm [shape: f32[16,32], index: 17, kind: output, shape index: {}]
  %s18 = sld [smem:[#allocation0]]
  $region78: #{tpu_custom_call.1} parent=0
    _
  %s20 = ssub.s32 1, %s18
  %s21 = scalar_select 0, %s20, %s18
  $region1: #{tpu_custom_call.1} parent=0
    #allocation2 [shape = 'u8[8192]{0}', space=vmem, size = 0x2000, scoped, tag = 'output window, operand 0, single buffered']
    #allocation3 [shape = 's32[1]{0}', space=sflag, size = 0x4, scoped, tag = 'scoped memory for tpu_custom_call.1']
    %22 = vsyncpa [#allocation3], 0
    // Predicated region
    $region2: #{tpu_custom_call.1} parent=1 // pred_check
      _
    $region3: #{tpu_custom_call.1} parent=1 // pred_check_branch
      %24 = sbr.rel (0) target = $region5
    $region4: #{tpu_custom_call.1} parent=1 // pred_region
      _
    $region5: #{tpu_custom_call.1} parent=1 // pred_fallthru
      _
    // Predicated region
    $region6: #{tpu_custom_call.1} parent=1 // pred_check
      _
    $region7: #{tpu_custom_call.1} parent=1 // pred_check_branch
      %26 = sbr.rel (0) target = $region9
    $region8: #{tpu_custom_call.1} parent=1 // pred_region
      _
    $region9: #{tpu_custom_call.1} parent=1 // pred_fallthru
      _
    // Predicated region
    $region10: #{tpu_custom_call.1} parent=1 // pred_check
      _
    $region11: #{tpu_custom_call.1} parent=1 // pred_check_branch
      %28 = sbr.rel (0) target = $region13
    $region12: #{tpu_custom_call.1} parent=1 // pred_region
      _
    $region13: #{tpu_custom_call.1} parent=1 // pred_fallthru
      _
    // Predicated region
    $region14: #{tpu_custom_call.1} parent=1 // pred_check
      _
    $region15: #{tpu_custom_call.1} parent=1 // pred_check_branch
      %30 = sbr.rel (0) target = $region17
    $region16: #{tpu_custom_call.1} parent=1 // pred_region
      _
    $region17: #{tpu_custom_call.1} parent=1 // pred_fallthru
      _
    // Predicated region
    $region18: #{tpu_custom_call.1} parent=1 // pred_check
      _
    $region19: #{tpu_custom_call.1} parent=1 // pred_check_branch
      %32 = sbr.rel (0) target = $region21
    $region20: #{tpu_custom_call.1} parent=1 // pred_region
      _
    $region21: #{tpu_custom_call.1} parent=1 // pred_fallthru
      _
    // Predicated region
    $region22: #{tpu_custom_call.1} parent=1 // pred_check
      _
    $region23: #{tpu_custom_call.1} parent=1 // pred_check_branch
      %34 = sbr.rel (0) target = $region25
    $region24: #{tpu_custom_call.1} parent=1 // pred_region
      _
    $region25: #{tpu_custom_call.1} parent=1 // pred_fallthru
      _
    // Predicated region
    $region26: #{tpu_custom_call.1} parent=1 // pred_check
      _
    $region27: #{tpu_custom_call.1} parent=1 // pred_check_branch
      %36 = sbr.rel (0) target = $region29
    $region28: #{tpu_custom_call.1} parent=1 // pred_region
      _
    $region29: #{tpu_custom_call.1} parent=1 // pred_fallthru
      _
    // Predicated region
    $region30: #{tpu_custom_call.1} parent=1 // pred_check
      _
    $region31: #{tpu_custom_call.1} parent=1 // pred_check_branch
      %38 = sbr.rel (0) target = $region33
    $region32: #{tpu_custom_call.1} parent=1 // pred_region
      _
    $region33: #{tpu_custom_call.1} parent=1 // pred_fallthru
      _
    // Predicated region
    $region34: #{tpu_custom_call.1} parent=1 // pred_check
      _
    $region35: #{tpu_custom_call.1} parent=1 // pred_check_branch
      %40 = sbr.rel (0) target = $region37
    $region36: #{tpu_custom_call.1} parent=1 // pred_region
      _
    $region37: #{tpu_custom_call.1} parent=1 // pred_fallthru
      _
    // Predicated region
    $region38: #{tpu_custom_call.1} parent=1 // pred_check
      _
    $region39: #{tpu_custom_call.1} parent=1 // pred_check_branch
      %42 = sbr.rel (0) target = $region41
    $region40: #{tpu_custom_call.1} parent=1 // pred_region
      _
    $region41: #{tpu_custom_call.1} parent=1 // pred_fallthru
      _
    // Predicated region
    $region42: #{tpu_custom_call.1} parent=1 // pred_check
      _
    $region43: #{tpu_custom_call.1} parent=1 // pred_check_branch
      %44 = sbr.rel (0) target = $region45
    $region44: #{tpu_custom_call.1} parent=1 // pred_region
      _
    $region45: #{tpu_custom_call.1} parent=1 // pred_fallthru
      _
    // Predicated region
    $region46: #{tpu_custom_call.1} parent=1 // pred_check
      _
    $region47: #{tpu_custom_call.1} parent=1 // pred_check_branch
      %46 = sbr.rel (0) target = $region49
    $region48: #{tpu_custom_call.1} parent=1 // pred_region
      _
    $region49: #{tpu_custom_call.1} parent=1 // pred_fallthru
      _
    // Predicated region
    $region50: #{tpu_custom_call.1} parent=1 // pred_check
      _
    $region51: #{tpu_custom_call.1} parent=1 // pred_check_branch
      %48 = sbr.rel (0) target = $region53
    $region52: #{tpu_custom_call.1} parent=1 // pred_region
      _
    $region53: #{tpu_custom_call.1} parent=1 // pred_fallthru
      _
    // Predicated region
    $region54: #{tpu_custom_call.1} parent=1 // pred_check
      _
    $region55: #{tpu_custom_call.1} parent=1 // pred_check_branch
      %50 = sbr.rel (0) target = $region57
    $region56: #{tpu_custom_call.1} parent=1 // pred_region
      _
    $region57: #{tpu_custom_call.1} parent=1 // pred_fallthru
      _
    // Predicated region
    $region58: #{tpu_custom_call.1} parent=1 // pred_check
      _
    $region59: #{tpu_custom_call.1} parent=1 // pred_check_branch
      %52 = sbr.rel (0) target = $region61
    $region60: #{tpu_custom_call.1} parent=1 // pred_region
      _
    $region61: #{tpu_custom_call.1} parent=1 // pred_fallthru
      _
    // Predicated region
    $region62: #{tpu_custom_call.1} parent=1 // pred_check
      _
    $region63: #{tpu_custom_call.1} parent=1 // pred_check_branch
      %54 = sbr.rel (0) target = $region65
    $region64: #{tpu_custom_call.1} parent=1 // pred_region
      _
    $region65: #{tpu_custom_call.1} parent=1 // pred_fallthru
      _
    // Predicated region
    $region66: #{tpu_custom_call.1} parent=1 // pred_check
      _
    $region67: #{tpu_custom_call.1} parent=1 // pred_check_branch
      %56 = sbr.rel (0) target = $region69
    $region68: #{tpu_custom_call.1} parent=1 // pred_region
      _
    $region69: #{tpu_custom_call.1} parent=1 // pred_fallthru
      _
    %v58 = vld [vmem:[%s0] sm:$0xff]
    %v59 = vld [vmem:[%s0 + $0x8] sm:$0xff]
    %v60 = vld [vmem:[%s1] sm:$0x1]
    %v61 = vld [vmem:[%s2] sm:$0x1]
    %vm62 = vcmask 261120
    %v63 = vsel %vm62, %v58, 0.0
    %64 = vadd.xlane.f32.xlu0 %v63
    %v65 = vpop.xlane.xlu0 %64
    %v66 = vsel %vm62, %v59, 0.0
    %67 = vadd.xlane.f32.xlu0 %v66
    %v68 = vpop.xlane.xlu0 %67
    %v69 = vrcp.pop 32.0
    %v70 = vmul.f32 %v65, %v69
    %v71 = vmul.f32 %v68, %v69
    %v72 = vsub.f32 %v58, %v70
    %v73 = vsub.f32 %v59, %v71
    %v74 = vmul.f32 %v72, %v72
    %v75 = vmul.f32 %v73, %v73
    %v76 = vsel %vm62, %v74, 0.0
    %77 = vadd.xlane.f32.xlu0 %v76
    %v78 = vpop.xlane.xlu0 %77
    %v79 = vsel %vm62, %v75, 0.0
    %80 = vadd.xlane.f32.xlu0 %v79
    %v81 = vpop.xlane.xlu0 %80
    %v82 = vmul.f32 %v78, %v69
    %v83 = vmul.f32 %v81, %v69
    %v84 = vadd.f32 %v82, 1e-05
    %v85 = vadd.f32 %v83, 1e-05
    %v86 = vrsqrt.pop %v84
    %v87 = vrsqrt.pop %v85
    %v88 = vmul.f32 %v72, %v86
    %v89 = vmul.f32 %v73, %v87
    %v91 = vlaneseq
    %v92 = vshrl.u32 %v91, 7
    %v93 = vsub.s32 0, %v92
    %v94 = vrot.slane %v60, %v93
    %v96 = vmul.f32 %v88, %v94
    %v97 = vmul.f32 %v89, %v94
    %v99 = vlaneseq
    %v100 = vshrl.u32 %v99, 7
    %v101 = vsub.s32 0, %v100
    %v102 = vrot.slane %v61, %v101
    %v104 = vadd.f32 %v96, %v102
    %v105 = vadd.f32 %v97, %v102
    %v106 = vpack.c.bf16 %v105, %v104
    %v107 = vld [vmem:[%s3] sm:$0xf]
    %v108 = vld [vmem:[%s3 + $0x4] sm:$0xf]
    %v109 = vld [vmem:[%s3 + $0x8] sm:$0xf]
    %v110 = vld [vmem:[%s3 + $0xc] sm:$0xf]
    %v111 = vld [vmem:[%s4] sm:$0x1]
    %v113 = vlaneseq
    %v114 = vshrl.u32 %v113, 7
    %v115 = vsub.s32 0, %v114
    %v116 = vrot.slane %v111, %v115
    %v122 = vunpack.c.l.b16 %v107
    %v123 = vunpack.c.l.b16 %v108
    %v124 = vunpack.c.l.b16 %v109
    %v125 = vunpack.c.l.b16 %v110
    %v126 = vpack.c.b16 %v123, %v122
    %v127 = vpack.c.b16 %v125, %v124
    %v131 = vsel %vm62, %v106, 0
    %133 = vmatprep.subr.bf16.mxu0 0
    %134 = vmatpush1.bf16.msra.mxu0 %v126
    %135 = vmatprep.subr.bf16.mxu0 0
    %136 = vmatpush1.bf16.msra.mxu0 %v127
    %137 = vmatprep.subr.bf16.mxu0 0
    %138 = vmatpush1.bf16.msra.mxu0 0
    %139 = vmatprep.subr.bf16.mxu0 0
    %140 = vmatpush1.bf16.msra.mxu0 0
    %141 = vmatprep.subr.bf16.mxu0 0
    %142 = vmatpush1.bf16.msra.mxu0 0
    %143 = vmatprep.subr.bf16.mxu0 0
    %144 = vmatpush1.bf16.msra.mxu0 0
    %145 = vmatprep.subr.bf16.mxu0 0
    %146 = vmatpush1.bf16.msra.mxu0 0
    %147 = vmatprep.subr.bf16.mxu0 0
    %148 = vmatpush1.bf16.msra.mxu0 0
    %149 = vmatprep.subr.bf16.mxu0 0
    %150 = vmatpush1.bf16.msra.mxu0 0
    %151 = vmatprep.subr.bf16.mxu0 0
    %152 = vmatpush1.bf16.msra.mxu0 0
    %153 = vmatprep.subr.bf16.mxu0 0
    %154 = vmatpush1.bf16.msra.mxu0 0
    %155 = vmatprep.subr.bf16.mxu0 0
    %156 = vmatpush1.bf16.msra.mxu0 0
    %157 = vmatprep.subr.bf16.mxu0 0
    %158 = vmatpush1.bf16.msra.mxu0 0
    %159 = vmatprep.subr.bf16.mxu0 0
    %160 = vmatpush1.bf16.msra.mxu0 0
    %161 = vmatprep.subr.bf16.mxu0 0
    %162 = vmatpush1.bf16.msra.mxu0 0
    %163 = vmatprep.subr.bf16.mxu0 0
    %164 = vmatpush1.bf16.msra.mxu0 0
    %165 = vmatprep.mubr.bf16.mxu0 0
    %166 = vmatmul.mubr.bf16.gmra.mrb[0].mxu0 %v131
    %v167 = vpop.f32.mrb[0].mxu0
    %v168 = vadd.f32 %v116, %v167
    %v169 = vpop.f32.mrb[0].mxu0
    %v170 = vpop.f32.mrb[0].mxu0
    %v171 = vadd.f32 %v116, %v170
    %v172 = vpop.f32.mrb[0].mxu0
    %173 = vdwg.mxu0
    %v174 = vld [vmem:[%s5] sm:$0xf]
    %v175 = vld [vmem:[%s5 + $0x4] sm:$0xf]
    %v176 = vld [vmem:[%s5 + $0x8] sm:$0xf]
    %v177 = vld [vmem:[%s5 + $0xc] sm:$0xf]
    %v178 = vld [vmem:[%s6] sm:$0x1]
    %v180 = vlaneseq
    %v181 = vshrl.u32 %v180, 7
    %v182 = vsub.s32 0, %v181
    %v183 = vrot.slane %v178, %v182
    %v189 = vunpack.c.l.b16 %v174
    %v190 = vunpack.c.l.b16 %v175
    %v191 = vunpack.c.l.b16 %v176
    %v192 = vunpack.c.l.b16 %v177
    %v193 = vpack.c.b16 %v190, %v189
    %v194 = vpack.c.b16 %v192, %v191
    %197 = vmatprep.subr.bf16.mxu0 0
    %198 = vmatpush1.bf16.msra.mxu0 %v193
    %199 = vmatprep.subr.bf16.mxu0 0
    %200 = vmatpush1.bf16.msra.mxu0 %v194
    %201 = vmatprep.subr.bf16.mxu0 0
    %202 = vmatpush1.bf16.msra.mxu0 0
    %203 = vmatprep.subr.bf16.mxu0 0
    %204 = vmatpush1.bf16.msra.mxu0 0
    %205 = vmatprep.subr.bf16.mxu0 0
    %206 = vmatpush1.bf16.msra.mxu0 0
    %207 = vmatprep.subr.bf16.mxu0 0
    %208 = vmatpush1.bf16.msra.mxu0 0
    %209 = vmatprep.subr.bf16.mxu0 0
    %210 = vmatpush1.bf16.msra.mxu0 0
    %211 = vmatprep.subr.bf16.mxu0 0
    %212 = vmatpush1.bf16.msra.mxu0 0
    %213 = vmatprep.subr.bf16.mxu0 0
    %214 = vmatpush1.bf16.msra.mxu0 0
    %215 = vmatprep.subr.bf16.mxu0 0
    %216 = vmatpush1.bf16.msra.mxu0 0
    %217 = vmatprep.subr.bf16.mxu0 0
    %218 = vmatpush1.bf16.msra.mxu0 0
    %219 = vmatprep.subr.bf16.mxu0 0
    %220 = vmatpush1.bf16.msra.mxu0 0
    %221 = vmatprep.subr.bf16.mxu0 0
    %222 = vmatpush1.bf16.msra.mxu0 0
    %223 = vmatprep.subr.bf16.mxu0 0
    %224 = vmatpush1.bf16.msra.mxu0 0
    %225 = vmatprep.subr.bf16.mxu0 0
    %226 = vmatpush1.bf16.msra.mxu0 0
    %227 = vmatprep.subr.bf16.mxu0 0
    %228 = vmatpush1.bf16.msra.mxu0 0
    %229 = vmatprep.mubr.bf16.mxu0 0
    %230 = vmatmul.mubr.bf16.gmra.mrb[0].mxu0 %v131
    %v231 = vpop.f32.mrb[0].mxu0
    %v232 = vadd.f32 %v183, %v231
    %v233 = vpop.f32.mrb[0].mxu0
    %v234 = vpop.f32.mrb[0].mxu0
    %v235 = vadd.f32 %v183, %v234
    %v236 = vpop.f32.mrb[0].mxu0
    %237 = vdwg.mxu0
    %v238 = vld [vmem:[%s7] sm:$0xf]
    %v239 = vld [vmem:[%s7 + $0x4] sm:$0xf]
    %v240 = vld [vmem:[%s7 + $0x8] sm:$0xf]
    %v241 = vld [vmem:[%s7 + $0xc] sm:$0xf]
    %v242 = vld [vmem:[%s8] sm:$0x1]
    %v244 = vlaneseq
    %v245 = vshrl.u32 %v244, 7
    %v246 = vsub.s32 0, %v245
    %v247 = vrot.slane %v242, %v246
    %v253 = vunpack.c.l.b16 %v238
    %v254 = vunpack.c.l.b16 %v239
    %v255 = vunpack.c.l.b16 %v240
    %v256 = vunpack.c.l.b16 %v241
    %v257 = vpack.c.b16 %v254, %v253
    %v258 = vpack.c.b16 %v256, %v255
    %261 = vmatprep.subr.bf16.mxu0 0
    %262 = vmatpush1.bf16.msra.mxu0 %v257
    %263 = vmatprep.subr.bf16.mxu0 0
    %264 = vmatpush1.bf16.msra.mxu0 %v258
    %265 = vmatprep.subr.bf16.mxu0 0
    %266 = vmatpush1.bf16.msra.mxu0 0
    %267 = vmatprep.subr.bf16.mxu0 0
    %268 = vmatpush1.bf16.msra.mxu0 0
    %269 = vmatprep.subr.bf16.mxu0 0
    %270 = vmatpush1.bf16.msra.mxu0 0
    %271 = vmatprep.subr.bf16.mxu0 0
    %272 = vmatpush1.bf16.msra.mxu0 0
    %273 = vmatprep.subr.bf16.mxu0 0
    %274 = vmatpush1.bf16.msra.mxu0 0
    %275 = vmatprep.subr.bf16.mxu0 0
    %276 = vmatpush1.bf16.msra.mxu0 0
    %277 = vmatprep.subr.bf16.mxu0 0
    %278 = vmatpush1.bf16.msra.mxu0 0
    %279 = vmatprep.subr.bf16.mxu0 0
    %280 = vmatpush1.bf16.msra.mxu0 0
    %281 = vmatprep.subr.bf16.mxu0 0
    %282 = vmatpush1.bf16.msra.mxu0 0
    %283 = vmatprep.subr.bf16.mxu0 0
    %284 = vmatpush1.bf16.msra.mxu0 0
    %285 = vmatprep.subr.bf16.mxu0 0
    %286 = vmatpush1.bf16.msra.mxu0 0
    %287 = vmatprep.subr.bf16.mxu0 0
    %288 = vmatpush1.bf16.msra.mxu0 0
    %289 = vmatprep.subr.bf16.mxu0 0
    %290 = vmatpush1.bf16.msra.mxu0 0
    %291 = vmatprep.subr.bf16.mxu0 0
    %292 = vmatpush1.bf16.msra.mxu0 0
    %293 = vmatprep.mubr.bf16.mxu0 0
    %294 = vmatmul.mubr.bf16.gmra.mrb[0].mxu0 %v131
    %v295 = vpop.f32.mrb[0].mxu0
    %v296 = vadd.f32 %v247, %v295
    %v297 = vpop.f32.mrb[0].mxu0
    %v298 = vpop.f32.mrb[0].mxu0
    %v299 = vadd.f32 %v247, %v298
    %v300 = vpop.f32.mrb[0].mxu0
    %301 = vdwg.mxu0
    %s302 = scalar_lea.vmem %s3, 16
    %v303 = vld [vmem:[%s302] sm:$0xf]
    %v304 = vld [vmem:[%s302 + $0x4] sm:$0xf]
    %v305 = vld [vmem:[%s302 + $0x8] sm:$0xf]
    %v306 = vld [vmem:[%s302 + $0xc] sm:$0xf]
    %s307 = scalar_lea.vmem %s4, 1
    %v308 = vld [vmem:[%s307] sm:$0x1]
    %v310 = vlaneseq
    %v311 = vshrl.u32 %v310, 7
    %v312 = vsub.s32 0, %v311
    %v313 = vrot.slane %v308, %v312
    %v319 = vunpack.c.l.b16 %v303
    %v320 = vunpack.c.l.b16 %v304
    %v321 = vunpack.c.l.b16 %v305
    %v322 = vunpack.c.l.b16 %v306
    %v323 = vpack.c.b16 %v320, %v319
    %v324 = vpack.c.b16 %v322, %v321
    %327 = vmatprep.subr.bf16.mxu0 0
    %328 = vmatpush1.bf16.msra.mxu0 %v323
    %329 = vmatprep.subr.bf16.mxu0 0
    %330 = vmatpush1.bf16.msra.mxu0 %v324
    %331 = vmatprep.subr.bf16.mxu0 0
    %332 = vmatpush1.bf16.msra.mxu0 0
    %333 = vmatprep.subr.bf16.mxu0 0
    %334 = vmatpush1.bf16.msra.mxu0 0
    %335 = vmatprep.subr.bf16.mxu0 0
    %336 = vmatpush1.bf16.msra.mxu0 0
    %337 = vmatprep.subr.bf16.mxu0 0
    %338 = vmatpush1.bf16.msra.mxu0 0
    %339 = vmatprep.subr.bf16.mxu0 0
    %340 = vmatpush1.bf16.msra.mxu0 0
    %341 = vmatprep.subr.bf16.mxu0 0
    %342 = vmatpush1.bf16.msra.mxu0 0
    %343 = vmatprep.subr.bf16.mxu0 0
    %344 = vmatpush1.bf16.msra.mxu0 0
    %345 = vmatprep.subr.bf16.mxu0 0
    %346 = vmatpush1.bf16.msra.mxu0 0
    %347 = vmatprep.subr.bf16.mxu0 0
    %348 = vmatpush1.bf16.msra.mxu0 0
    %349 = vmatprep.subr.bf16.mxu0 0
    %350 = vmatpush1.bf16.msra.mxu0 0
    %351 = vmatprep.subr.bf16.mxu0 0
    %352 = vmatpush1.bf16.msra.mxu0 0
    %353 = vmatprep.subr.bf16.mxu0 0
    %354 = vmatpush1.bf16.msra.mxu0 0
    %355 = vmatprep.subr.bf16.mxu0 0
    %356 = vmatpush1.bf16.msra.mxu0 0
    %357 = vmatprep.subr.bf16.mxu0 0
    %358 = vmatpush1.bf16.msra.mxu0 0
    %359 = vmatprep.mubr.bf16.mxu0 0
    %360 = vmatmul.mubr.bf16.gmra.mrb[0].mxu0 %v131
    %v361 = vpop.f32.mrb[0].mxu0
    %v362 = vadd.f32 %v313, %v361
    %v363 = vpop.f32.mrb[0].mxu0
    %v364 = vpop.f32.mrb[0].mxu0
    %v365 = vadd.f32 %v313, %v364
    %v366 = vpop.f32.mrb[0].mxu0
    %367 = vdwg.mxu0
    %s368 = scalar_lea.vmem %s5, 16
    %v369 = vld [vmem:[%s368] sm:$0xf]
    %v370 = vld [vmem:[%s368 + $0x4] sm:$0xf]
    %v371 = vld [vmem:[%s368 + $0x8] sm:$0xf]
    %v372 = vld [vmem:[%s368 + $0xc] sm:$0xf]
    %s373 = scalar_lea.vmem %s6, 1
    %v374 = vld [vmem:[%s373] sm:$0x1]
    %v376 = vlaneseq
    %v377 = vshrl.u32 %v376, 7
    %v378 = vsub.s32 0, %v377
    %v379 = vrot.slane %v374, %v378
    %v385 = vunpack.c.l.b16 %v369
    %v386 = vunpack.c.l.b16 %v370
    %v387 = vunpack.c.l.b16 %v371
    %v388 = vunpack.c.l.b16 %v372
    %v389 = vpack.c.b16 %v386, %v385
    %v390 = vpack.c.b16 %v388, %v387
    %393 = vmatprep.subr.bf16.mxu0 0
    %394 = vmatpush1.bf16.msra.mxu0 %v389
    %395 = vmatprep.subr.bf16.mxu0 0
    %396 = vmatpush1.bf16.msra.mxu0 %v390
    %397 = vmatprep.subr.bf16.mxu0 0
    %398 = vmatpush1.bf16.msra.mxu0 0
    %399 = vmatprep.subr.bf16.mxu0 0
    %400 = vmatpush1.bf16.msra.mxu0 0
    %401 = vmatprep.subr.bf16.mxu0 0
    %402 = vmatpush1.bf16.msra.mxu0 0
    %403 = vmatprep.subr.bf16.mxu0 0
    %404 = vmatpush1.bf16.msra.mxu0 0
    %405 = vmatprep.subr.bf16.mxu0 0
    %406 = vmatpush1.bf16.msra.mxu0 0
    %407 = vmatprep.subr.bf16.mxu0 0
    %408 = vmatpush1.bf16.msra.mxu0 0
    %409 = vmatprep.subr.bf16.mxu0 0
    %410 = vmatpush1.bf16.msra.mxu0 0
    %411 = vmatprep.subr.bf16.mxu0 0
    %412 = vmatpush1.bf16.msra.mxu0 0
    %413 = vmatprep.subr.bf16.mxu0 0
    %414 = vmatpush1.bf16.msra.mxu0 0
    %415 = vmatprep.subr.bf16.mxu0 0
    %416 = vmatpush1.bf16.msra.mxu0 0
    %417 = vmatprep.subr.bf16.mxu0 0
    %418 = vmatpush1.bf16.msra.mxu0 0
    %419 = vmatprep.subr.bf16.mxu0 0
    %420 = vmatpush1.bf16.msra.mxu0 0
    %421 = vmatprep.subr.bf16.mxu0 0
    %422 = vmatpush1.bf16.msra.mxu0 0
    %423 = vmatprep.subr.bf16.mxu0 0
    %424 = vmatpush1.bf16.msra.mxu0 0
    %425 = vmatprep.mubr.bf16.mxu0 0
    %426 = vmatmul.mubr.bf16.gmra.mrb[0].mxu0 %v131
    %v427 = vpop.f32.mrb[0].mxu0
    %v428 = vadd.f32 %v379, %v427
    %v429 = vpop.f32.mrb[0].mxu0
    %v430 = vpop.f32.mrb[0].mxu0
    %v431 = vadd.f32 %v379, %v430
    %v432 = vpop.f32.mrb[0].mxu0
    %433 = vdwg.mxu0
    %s434 = scalar_lea.vmem %s7, 16
    %v435 = vld [vmem:[%s434] sm:$0xf]
    %v436 = vld [vmem:[%s434 + $0x4] sm:$0xf]
    %v437 = vld [vmem:[%s434 + $0x8] sm:$0xf]
    %v438 = vld [vmem:[%s434 + $0xc] sm:$0xf]
    %s439 = scalar_lea.vmem %s8, 1
    %v440 = vld [vmem:[%s439] sm:$0x1]
    %v442 = vlaneseq
    %v443 = vshrl.u32 %v442, 7
    %v444 = vsub.s32 0, %v443
    %v445 = vrot.slane %v440, %v444
    %v451 = vunpack.c.l.b16 %v435
    %v452 = vunpack.c.l.b16 %v436
    %v453 = vunpack.c.l.b16 %v437
    %v454 = vunpack.c.l.b16 %v438
    %v455 = vpack.c.b16 %v452, %v451
    %v456 = vpack.c.b16 %v454, %v453
    %459 = vmatprep.subr.bf16.mxu0 0
    %460 = vmatpush1.bf16.msra.mxu0 %v455
    %461 = vmatprep.subr.bf16.mxu0 0
    %462 = vmatpush1.bf16.msra.mxu0 %v456
    %463 = vmatprep.subr.bf16.mxu0 0
    %464 = vmatpush1.bf16.msra.mxu0 0
    %465 = vmatprep.subr.bf16.mxu0 0
    %466 = vmatpush1.bf16.msra.mxu0 0
    %467 = vmatprep.subr.bf16.mxu0 0
    %468 = vmatpush1.bf16.msra.mxu0 0
    %469 = vmatprep.subr.bf16.mxu0 0
    %470 = vmatpush1.bf16.msra.mxu0 0
    %471 = vmatprep.subr.bf16.mxu0 0
    %472 = vmatpush1.bf16.msra.mxu0 0
    %473 = vmatprep.subr.bf16.mxu0 0
    %474 = vmatpush1.bf16.msra.mxu0 0
    %475 = vmatprep.subr.bf16.mxu0 0
    %476 = vmatpush1.bf16.msra.mxu0 0
    %477 = vmatprep.subr.bf16.mxu0 0
    %478 = vmatpush1.bf16.msra.mxu0 0
    %479 = vmatprep.subr.bf16.mxu0 0
    %480 = vmatpush1.bf16.msra.mxu0 0
    %481 = vmatprep.subr.bf16.mxu0 0
    %482 = vmatpush1.bf16.msra.mxu0 0
    %483 = vmatprep.subr.bf16.mxu0 0
    %484 = vmatpush1.bf16.msra.mxu0 0
    %485 = vmatprep.subr.bf16.mxu0 0
    %486 = vmatpush1.bf16.msra.mxu0 0
    %487 = vmatprep.subr.bf16.mxu0 0
    %488 = vmatpush1.bf16.msra.mxu0 0
    %489 = vmatprep.subr.bf16.mxu0 0
    %490 = vmatpush1.bf16.msra.mxu0 0
    %491 = vmatprep.mubr.bf16.mxu0 0
    %492 = vmatmul.mubr.bf16.gmra.mrb[0].mxu0 %v131
    %v493 = vpop.f32.mrb[0].mxu0
    %v494 = vadd.f32 %v445, %v493
    %v495 = vpop.f32.mrb[0].mxu0
    %v496 = vpop.f32.mrb[0].mxu0
    %v497 = vadd.f32 %v445, %v496
    %v498 = vpop.f32.mrb[0].mxu0
    %499 = vdwg.mxu0
    %s500 = scalar_lea.vmem %s3, 32
    %v501 = vld [vmem:[%s500] sm:$0xf]
    %v502 = vld [vmem:[%s500 + $0x4] sm:$0xf]
    %v503 = vld [vmem:[%s500 + $0x8] sm:$0xf]
    %v504 = vld [vmem:[%s500 + $0xc] sm:$0xf]
    %s505 = scalar_lea.vmem %s4, 2
    %v506 = vld [vmem:[%s505] sm:$0x1]
    %v508 = vlaneseq
    %v509 = vshrl.u32 %v508, 7
    %v510 = vsub.s32 0, %v509
    %v511 = vrot.slane %v506, %v510
    %v517 = vunpack.c.l.b16 %v501
    %v518 = vunpack.c.l.b16 %v502
    %v519 = vunpack.c.l.b16 %v503
    %v520 = vunpack.c.l.b16 %v504
    %v521 = vpack.c.b16 %v518, %v517
    %v522 = vpack.c.b16 %v520, %v519
    %525 = vmatprep.subr.bf16.mxu0 0
    %526 = vmatpush1.bf16.msra.mxu0 %v521
    %527 = vmatprep.subr.bf16.mxu0 0
    %528 = vmatpush1.bf16.msra.mxu0 %v522
    %529 = vmatprep.subr.bf16.mxu0 0
    %530 = vmatpush1.bf16.msra.mxu0 0
    %531 = vmatprep.subr.bf16.mxu0 0
    %532 = vmatpush1.bf16.msra.mxu0 0
    %533 = vmatprep.subr.bf16.mxu0 0
    %534 = vmatpush1.bf16.msra.mxu0 0
    %535 = vmatprep.subr.bf16.mxu0 0
    %536 = vmatpush1.bf16.msra.mxu0 0
    %537 = vmatprep.subr.bf16.mxu0 0
    %538 = vmatpush1.bf16.msra.mxu0 0
    %539 = vmatprep.subr.bf16.mxu0 0
    %540 = vmatpush1.bf16.msra.mxu0 0
    %541 = vmatprep.subr.bf16.mxu0 0
    %542 = vmatpush1.bf16.msra.mxu0 0
    %543 = vmatprep.subr.bf16.mxu0 0
    %544 = vmatpush1.bf16.msra.mxu0 0
    %545 = vmatprep.subr.bf16.mxu0 0
    %546 = vmatpush1.bf16.msra.mxu0 0
    %547 = vmatprep.subr.bf16.mxu0 0
    %548 = vmatpush1.bf16.msra.mxu0 0
    %549 = vmatprep.subr.bf16.mxu0 0
    %550 = vmatpush1.bf16.msra.mxu0 0
    %551 = vmatprep.subr.bf16.mxu0 0
    %552 = vmatpush1.bf16.msra.mxu0 0
    %553 = vmatprep.subr.bf16.mxu0 0
    %554 = vmatpush1.bf16.msra.mxu0 0
    %555 = vmatprep.subr.bf16.mxu0 0
    %556 = vmatpush1.bf16.msra.mxu0 0
    %557 = vmatprep.mubr.bf16.mxu0 0
    %558 = vmatmul.mubr.bf16.gmra.mrb[0].mxu0 %v131
    %v559 = vpop.f32.mrb[0].mxu0
    %v560 = vadd.f32 %v511, %v559
    %v561 = vpop.f32.mrb[0].mxu0
    %v562 = vpop.f32.mrb[0].mxu0
    %v563 = vadd.f32 %v511, %v562
    %v564 = vpop.f32.mrb[0].mxu0
    %565 = vdwg.mxu0
    %s566 = scalar_lea.vmem %s5, 32
    %v567 = vld [vmem:[%s566] sm:$0xf]
    %v568 = vld [vmem:[%s566 + $0x4] sm:$0xf]
    %v569 = vld [vmem:[%s566 + $0x8] sm:$0xf]
    %v570 = vld [vmem:[%s566 + $0xc] sm:$0xf]
    %s571 = scalar_lea.vmem %s6, 2
    %v572 = vld [vmem:[%s571] sm:$0x1]
    %v574 = vlaneseq
    %v575 = vshrl.u32 %v574, 7
    %v576 = vsub.s32 0, %v575
    %v577 = vrot.slane %v572, %v576
    %v583 = vunpack.c.l.b16 %v567
    %v584 = vunpack.c.l.b16 %v568
    %v585 = vunpack.c.l.b16 %v569
    %v586 = vunpack.c.l.b16 %v570
    %v587 = vpack.c.b16 %v584, %v583
    %v588 = vpack.c.b16 %v586, %v585
    %591 = vmatprep.subr.bf16.mxu0 0
    %592 = vmatpush1.bf16.msra.mxu0 %v587
    %593 = vmatprep.subr.bf16.mxu0 0
    %594 = vmatpush1.bf16.msra.mxu0 %v588
    %595 = vmatprep.subr.bf16.mxu0 0
    %596 = vmatpush1.bf16.msra.mxu0 0
    %597 = vmatprep.subr.bf16.mxu0 0
    %598 = vmatpush1.bf16.msra.mxu0 0
    %599 = vmatprep.subr.bf16.mxu0 0
    %600 = vmatpush1.bf16.msra.mxu0 0
    %601 = vmatprep.subr.bf16.mxu0 0
    %602 = vmatpush1.bf16.msra.mxu0 0
    %603 = vmatprep.subr.bf16.mxu0 0
    %604 = vmatpush1.bf16.msra.mxu0 0
    %605 = vmatprep.subr.bf16.mxu0 0
    %606 = vmatpush1.bf16.msra.mxu0 0
    %607 = vmatprep.subr.bf16.mxu0 0
    %608 = vmatpush1.bf16.msra.mxu0 0
    %609 = vmatprep.subr.bf16.mxu0 0
    %610 = vmatpush1.bf16.msra.mxu0 0
    %611 = vmatprep.subr.bf16.mxu0 0
    %612 = vmatpush1.bf16.msra.mxu0 0
    %613 = vmatprep.subr.bf16.mxu0 0
    %614 = vmatpush1.bf16.msra.mxu0 0
    %615 = vmatprep.subr.bf16.mxu0 0
    %616 = vmatpush1.bf16.msra.mxu0 0
    %617 = vmatprep.subr.bf16.mxu0 0
    %618 = vmatpush1.bf16.msra.mxu0 0
    %619 = vmatprep.subr.bf16.mxu0 0
    %620 = vmatpush1.bf16.msra.mxu0 0
    %621 = vmatprep.subr.bf16.mxu0 0
    %622 = vmatpush1.bf16.msra.mxu0 0
    %623 = vmatprep.mubr.bf16.mxu0 0
    %624 = vmatmul.mubr.bf16.gmra.mrb[0].mxu0 %v131
    %v625 = vpop.f32.mrb[0].mxu0
    %v626 = vadd.f32 %v577, %v625
    %v627 = vpop.f32.mrb[0].mxu0
    %v628 = vpop.f32.mrb[0].mxu0
    %v629 = vadd.f32 %v577, %v628
    %v630 = vpop.f32.mrb[0].mxu0
    %631 = vdwg.mxu0
    %s632 = scalar_lea.vmem %s7, 32
    %v633 = vld [vmem:[%s632] sm:$0xf]
    %v634 = vld [vmem:[%s632 + $0x4] sm:$0xf]
    %v635 = vld [vmem:[%s632 + $0x8] sm:$0xf]
    %v636 = vld [vmem:[%s632 + $0xc] sm:$0xf]
    %s637 = scalar_lea.vmem %s8, 2
    %v638 = vld [vmem:[%s637] sm:$0x1]
    %v640 = vlaneseq
    %v641 = vshrl.u32 %v640, 7
    %v642 = vsub.s32 0, %v641
    %v643 = vrot.slane %v638, %v642
    %v649 = vunpack.c.l.b16 %v633
    %v650 = vunpack.c.l.b16 %v634
    %v651 = vunpack.c.l.b16 %v635
    %v652 = vunpack.c.l.b16 %v636
    %v653 = vpack.c.b16 %v650, %v649
    %v654 = vpack.c.b16 %v652, %v651
    %657 = vmatprep.subr.bf16.mxu0 0
    %658 = vmatpush1.bf16.msra.mxu0 %v653
    %659 = vmatprep.subr.bf16.mxu0 0
    %660 = vmatpush1.bf16.msra.mxu0 %v654
    %661 = vmatprep.subr.bf16.mxu0 0
    %662 = vmatpush1.bf16.msra.mxu0 0
    %663 = vmatprep.subr.bf16.mxu0 0
    %664 = vmatpush1.bf16.msra.mxu0 0
    %665 = vmatprep.subr.bf16.mxu0 0
    %666 = vmatpush1.bf16.msra.mxu0 0
    %667 = vmatprep.subr.bf16.mxu0 0
    %668 = vmatpush1.bf16.msra.mxu0 0
    %669 = vmatprep.subr.bf16.mxu0 0
    %670 = vmatpush1.bf16.msra.mxu0 0
    %671 = vmatprep.subr.bf16.mxu0 0
    %672 = vmatpush1.bf16.msra.mxu0 0
    %673 = vmatprep.subr.bf16.mxu0 0
    %674 = vmatpush1.bf16.msra.mxu0 0
    %675 = vmatprep.subr.bf16.mxu0 0
    %676 = vmatpush1.bf16.msra.mxu0 0
    %677 = vmatprep.subr.bf16.mxu0 0
    %678 = vmatpush1.bf16.msra.mxu0 0
    %679 = vmatprep.subr.bf16.mxu0 0
    %680 = vmatpush1.bf16.msra.mxu0 0
    %681 = vmatprep.subr.bf16.mxu0 0
    %682 = vmatpush1.bf16.msra.mxu0 0
    %683 = vmatprep.subr.bf16.mxu0 0
    %684 = vmatpush1.bf16.msra.mxu0 0
    %685 = vmatprep.subr.bf16.mxu0 0
    %686 = vmatpush1.bf16.msra.mxu0 0
    %687 = vmatprep.subr.bf16.mxu0 0
    %688 = vmatpush1.bf16.msra.mxu0 0
    %689 = vmatprep.mubr.bf16.mxu0 0
    %690 = vmatmul.mubr.bf16.gmra.mrb[0].mxu0 %v131
    %v691 = vpop.f32.mrb[0].mxu0
    %v692 = vadd.f32 %v643, %v691
    %v693 = vpop.f32.mrb[0].mxu0
    %v694 = vpop.f32.mrb[0].mxu0
    %v695 = vadd.f32 %v643, %v694
    %v696 = vpop.f32.mrb[0].mxu0
    %697 = vdwg.mxu0
    %s698 = scalar_lea.vmem %s3, 48
    %v699 = vld [vmem:[%s698] sm:$0xf]
    %v700 = vld [vmem:[%s698 + $0x4] sm:$0xf]
    %v701 = vld [vmem:[%s698 + $0x8] sm:$0xf]
    %v702 = vld [vmem:[%s698 + $0xc] sm:$0xf]
    %s703 = scalar_lea.vmem %s4, 3
    %v704 = vld [vmem:[%s703] sm:$0x1]
    %v706 = vlaneseq
    %v707 = vshrl.u32 %v706, 7
    %v708 = vsub.s32 0, %v707
    %v709 = vrot.slane %v704, %v708
    %v715 = vunpack.c.l.b16 %v699
    %v716 = vunpack.c.l.b16 %v700
    %v717 = vunpack.c.l.b16 %v701
    %v718 = vunpack.c.l.b16 %v702
    %v719 = vpack.c.b16 %v716, %v715
    %v720 = vpack.c.b16 %v718, %v717
    %723 = vmatprep.subr.bf16.mxu0 0
    %724 = vmatpush1.bf16.msra.mxu0 %v719
    %725 = vmatprep.subr.bf16.mxu0 0
    %726 = vmatpush1.bf16.msra.mxu0 %v720
    %727 = vmatprep.subr.bf16.mxu0 0
    %728 = vmatpush1.bf16.msra.mxu0 0
    %729 = vmatprep.subr.bf16.mxu0 0
    %730 = vmatpush1.bf16.msra.mxu0 0
    %731 = vmatprep.subr.bf16.mxu0 0
    %732 = vmatpush1.bf16.msra.mxu0 0
    %733 = vmatprep.subr.bf16.mxu0 0
    %734 = vmatpush1.bf16.msra.mxu0 0
    %735 = vmatprep.subr.bf16.mxu0 0
    %736 = vmatpush1.bf16.msra.mxu0 0
    %737 = vmatprep.subr.bf16.mxu0 0
    %738 = vmatpush1.bf16.msra.mxu0 0
    %739 = vmatprep.subr.bf16.mxu0 0
    %740 = vmatpush1.bf16.msra.mxu0 0
    %741 = vmatprep.subr.bf16.mxu0 0
    %742 = vmatpush1.bf16.msra.mxu0 0
    %743 = vmatprep.subr.bf16.mxu0 0
    %744 = vmatpush1.bf16.msra.mxu0 0
    %745 = vmatprep.subr.bf16.mxu0 0
    %746 = vmatpush1.bf16.msra.mxu0 0
    %747 = vmatprep.subr.bf16.mxu0 0
    %748 = vmatpush1.bf16.msra.mxu0 0
    %749 = vmatprep.subr.bf16.mxu0 0
    %750 = vmatpush1.bf16.msra.mxu0 0
    %751 = vmatprep.subr.bf16.mxu0 0
    %752 = vmatpush1.bf16.msra.mxu0 0
    %753 = vmatprep.subr.bf16.mxu0 0
    %754 = vmatpush1.bf16.msra.mxu0 0
    %755 = vmatprep.mubr.bf16.mxu0 0
    %756 = vmatmul.mubr.bf16.gmra.mrb[0].mxu0 %v131
    %v757 = vpop.f32.mrb[0].mxu0
    %v758 = vadd.f32 %v709, %v757
    %v759 = vpop.f32.mrb[0].mxu0
    %v760 = vpop.f32.mrb[0].mxu0
    %v761 = vadd.f32 %v709, %v760
    %v762 = vpop.f32.mrb[0].mxu0
    %763 = vdwg.mxu0
    %s764 = scalar_lea.vmem %s5, 48
    %v765 = vld [vmem:[%s764] sm:$0xf]
    %v766 = vld [vmem:[%s764 + $0x4] sm:$0xf]
    %v767 = vld [vmem:[%s764 + $0x8] sm:$0xf]
    %v768 = vld [vmem:[%s764 + $0xc] sm:$0xf]
    %s769 = scalar_lea.vmem %s6, 3
    %v770 = vld [vmem:[%s769] sm:$0x1]
    %v772 = vlaneseq
    %v773 = vshrl.u32 %v772, 7
    %v774 = vsub.s32 0, %v773
    %v775 = vrot.slane %v770, %v774
    %v781 = vunpack.c.l.b16 %v765
    %v782 = vunpack.c.l.b16 %v766
    %v783 = vunpack.c.l.b16 %v767
    %v784 = vunpack.c.l.b16 %v768
    %v785 = vpack.c.b16 %v782, %v781
    %v786 = vpack.c.b16 %v784, %v783
    %789 = vmatprep.subr.bf16.mxu0 0
    %790 = vmatpush1.bf16.msra.mxu0 %v785
    %791 = vmatprep.subr.bf16.mxu0 0
    %792 = vmatpush1.bf16.msra.mxu0 %v786
    %793 = vmatprep.subr.bf16.mxu0 0
    %794 = vmatpush1.bf16.msra.mxu0 0
    %795 = vmatprep.subr.bf16.mxu0 0
    %796 = vmatpush1.bf16.msra.mxu0 0
    %797 = vmatprep.subr.bf16.mxu0 0
    %798 = vmatpush1.bf16.msra.mxu0 0
    %799 = vmatprep.subr.bf16.mxu0 0
    %800 = vmatpush1.bf16.msra.mxu0 0
    %801 = vmatprep.subr.bf16.mxu0 0
    %802 = vmatpush1.bf16.msra.mxu0 0
    %803 = vmatprep.subr.bf16.mxu0 0
    %804 = vmatpush1.bf16.msra.mxu0 0
    %805 = vmatprep.subr.bf16.mxu0 0
    %806 = vmatpush1.bf16.msra.mxu0 0
    %807 = vmatprep.subr.bf16.mxu0 0
    %808 = vmatpush1.bf16.msra.mxu0 0
    %809 = vmatprep.subr.bf16.mxu0 0
    %810 = vmatpush1.bf16.msra.mxu0 0
    %811 = vmatprep.subr.bf16.mxu0 0
    %812 = vmatpush1.bf16.msra.mxu0 0
    %813 = vmatprep.subr.bf16.mxu0 0
    %814 = vmatpush1.bf16.msra.mxu0 0
    %815 = vmatprep.subr.bf16.mxu0 0
    %816 = vmatpush1.bf16.msra.mxu0 0
    %817 = vmatprep.subr.bf16.mxu0 0
    %818 = vmatpush1.bf16.msra.mxu0 0
    %819 = vmatprep.subr.bf16.mxu0 0
    %820 = vmatpush1.bf16.msra.mxu0 0
    %821 = vmatprep.mubr.bf16.mxu0 0
    %822 = vmatmul.mubr.bf16.gmra.mrb[0].mxu0 %v131
    %v823 = vpop.f32.mrb[0].mxu0
    %v824 = vadd.f32 %v775, %v823
    %v825 = vpop.f32.mrb[0].mxu0
    %v826 = vpop.f32.mrb[0].mxu0
    %v827 = vadd.f32 %v775, %v826
    %v828 = vpop.f32.mrb[0].mxu0
    %829 = vdwg.mxu0
    %s830 = scalar_lea.vmem %s7, 48
    %v831 = vld [vmem:[%s830] sm:$0xf]
    %v832 = vld [vmem:[%s830 + $0x4] sm:$0xf]
    %v833 = vld [vmem:[%s830 + $0x8] sm:$0xf]
    %v834 = vld [vmem:[%s830 + $0xc] sm:$0xf]
    %s835 = scalar_lea.vmem %s8, 3
    %v836 = vld [vmem:[%s835] sm:$0x1]
    %v838 = vlaneseq
    %v839 = vshrl.u32 %v838, 7
    %v840 = vsub.s32 0, %v839
    %v841 = vrot.slane %v836, %v840
    %v847 = vunpack.c.l.b16 %v831
    %v848 = vunpack.c.l.b16 %v832
    %v849 = vunpack.c.l.b16 %v833
    %v850 = vunpack.c.l.b16 %v834
    %v851 = vpack.c.b16 %v848, %v847
    %v852 = vpack.c.b16 %v850, %v849
    %855 = vmatprep.subr.bf16.mxu0 0
    %856 = vmatpush1.bf16.msra.mxu0 %v851
    %857 = vmatprep.subr.bf16.mxu0 0
    %858 = vmatpush1.bf16.msra.mxu0 %v852
    %859 = vmatprep.subr.bf16.mxu0 0
    %860 = vmatpush1.bf16.msra.mxu0 0
    %861 = vmatprep.subr.bf16.mxu0 0
    %862 = vmatpush1.bf16.msra.mxu0 0
    %863 = vmatprep.subr.bf16.mxu0 0
    %864 = vmatpush1.bf16.msra.mxu0 0
    %865 = vmatprep.subr.bf16.mxu0 0
    %866 = vmatpush1.bf16.msra.mxu0 0
    %867 = vmatprep.subr.bf16.mxu0 0
    %868 = vmatpush1.bf16.msra.mxu0 0
    %869 = vmatprep.subr.bf16.mxu0 0
    %870 = vmatpush1.bf16.msra.mxu0 0
    %871 = vmatprep.subr.bf16.mxu0 0
    %872 = vmatpush1.bf16.msra.mxu0 0
    %873 = vmatprep.subr.bf16.mxu0 0
    %874 = vmatpush1.bf16.msra.mxu0 0
    %875 = vmatprep.subr.bf16.mxu0 0
    %876 = vmatpush1.bf16.msra.mxu0 0
    %877 = vmatprep.subr.bf16.mxu0 0
    %878 = vmatpush1.bf16.msra.mxu0 0
    %879 = vmatprep.subr.bf16.mxu0 0
    %880 = vmatpush1.bf16.msra.mxu0 0
    %881 = vmatprep.subr.bf16.mxu0 0
    %882 = vmatpush1.bf16.msra.mxu0 0
    %883 = vmatprep.subr.bf16.mxu0 0
    %884 = vmatpush1.bf16.msra.mxu0 0
    %885 = vmatprep.subr.bf16.mxu0 0
    %886 = vmatpush1.bf16.msra.mxu0 0
    %887 = vmatprep.mubr.bf16.mxu0 0
    %888 = vmatmul.mubr.bf16.gmra.mrb[0].mxu0 %v131
    %v889 = vpop.f32.mrb[0].mxu0
    %v890 = vadd.f32 %v841, %v889
    %v891 = vpop.f32.mrb[0].mxu0
    %v892 = vpop.f32.mrb[0].mxu0
    %v893 = vadd.f32 %v841, %v892
    %v894 = vpop.f32.mrb[0].mxu0
    %895 = vdwg.mxu0
    %v896 = vpack.c.bf16 %v168, %v168
    %v897 = vpack.c.bf16 %v171, %v171
    %v898 = vpack.c.bf16 %v362, %v362
    %v899 = vpack.c.bf16 %v365, %v365
    %v900 = vpack.c.bf16 %v560, %v560
    %v901 = vpack.c.bf16 %v563, %v563
    %v902 = vpack.c.bf16 %v758, %v758
    %v903 = vpack.c.bf16 %v761, %v761
    %v904 = vpack.c.bf16 %v232, %v232
    %v905 = vpack.c.bf16 %v235, %v235
    %v906 = vpack.c.bf16 %v428, %v428
    %v907 = vpack.c.bf16 %v431, %v431
    %v908 = vpack.c.bf16 %v626, %v626
    %v909 = vpack.c.bf16 %v629, %v629
    %v910 = vpack.c.bf16 %v824, %v824
    %v911 = vpack.c.bf16 %v827, %v827
    %v912 = vpack.c.bf16 %v296, %v296
    %v913 = vpack.c.bf16 %v299, %v299
    %v914 = vpack.c.bf16 %v494, %v494
    %v915 = vpack.c.bf16 %v497, %v497
    %v916 = vpack.c.bf16 %v692, %v692
    %v917 = vpack.c.bf16 %v695, %v695
    %v918 = vpack.c.bf16 %v890, %v890
    %v919 = vpack.c.bf16 %v893, %v893
    %vm920 = vcmask 64512
    %v922 = vsel %vm920, %v896, 0
    %v925 = vsel %vm920, %v904, 0
    %927 = vmatprep.subr.bf16.mxu0 0
    %928 = vmatpush1.bf16.xpose.msra.mxu0 %v925
    %929 = vmatprep.subr.bf16.mxu0 0
    %930 = vmatpush1.bf16.xpose.msra.mxu0 0
    %931 = vmatprep.subr.bf16.mxu0 0
    %932 = vmatpush1.bf16.xpose.msra.mxu0 0
    %933 = vmatprep.subr.bf16.mxu0 0
    %934 = vmatpush1.bf16.xpose.msra.mxu0 0
    %935 = vmatprep.subr.bf16.mxu0 0
    %936 = vmatpush1.bf16.xpose.msra.mxu0 0
    %937 = vmatprep.subr.bf16.mxu0 0
    %938 = vmatpush1.bf16.xpose.msra.mxu0 0
    %939 = vmatprep.subr.bf16.mxu0 0
    %940 = vmatpush1.bf16.xpose.msra.mxu0 0
    %941 = vmatprep.subr.bf16.mxu0 0
    %942 = vmatpush1.bf16.xpose.msra.mxu0 0
    %943 = vmatprep.subr.bf16.mxu0 0
    %944 = vmatpush1.bf16.xpose.msra.mxu0 0
    %945 = vmatprep.subr.bf16.mxu0 0
    %946 = vmatpush1.bf16.xpose.msra.mxu0 0
    %947 = vmatprep.subr.bf16.mxu0 0
    %948 = vmatpush1.bf16.xpose.msra.mxu0 0
    %949 = vmatprep.subr.bf16.mxu0 0
    %950 = vmatpush1.bf16.xpose.msra.mxu0 0
    %951 = vmatprep.subr.bf16.mxu0 0
    %952 = vmatpush1.bf16.xpose.msra.mxu0 0
    %953 = vmatprep.subr.bf16.mxu0 0
    %954 = vmatpush1.bf16.xpose.msra.mxu0 0
    %955 = vmatprep.subr.bf16.mxu0 0
    %956 = vmatpush1.bf16.xpose.msra.mxu0 0
    %957 = vmatprep.subr.bf16.mxu0 0
    %958 = vmatpush1.bf16.xpose.msra.mxu0 0
    %959 = vmatprep.mubr.bf16.mxu0 0
    %960 = vmatmul.mubr.bf16.gmra.mrb[0].mxu0 %v922
    %v961 = vpop.f32.mrb[0].mxu0
    %v962 = vadd.f32 0.0, %v961
    %v963 = vpop.f32.mrb[0].mxu0
    %v964 = vpop.f32.mrb[0].mxu0
    %v965 = vpop.f32.mrb[0].mxu0
    %966 = vdwg.mxu0
    %v968 = vsel %vm920, %v897, 0
    %v971 = vsel %vm920, %v905, 0
    %973 = vmatprep.subr.bf16.mxu0 0
    %974 = vmatpush1.bf16.xpose.msra.mxu0 %v971
    %975 = vmatprep.subr.bf16.mxu0 0
    %976 = vmatpush1.bf16.xpose.msra.mxu0 0
    %977 = vmatprep.subr.bf16.mxu0 0
    %978 = vmatpush1.bf16.xpose.msra.mxu0 0
    %979 = vmatprep.subr.bf16.mxu0 0
    %980 = vmatpush1.bf16.xpose.msra.mxu0 0
    %981 = vmatprep.subr.bf16.mxu0 0
    %982 = vmatpush1.bf16.xpose.msra.mxu0 0
    %983 = vmatprep.subr.bf16.mxu0 0
    %984 = vmatpush1.bf16.xpose.msra.mxu0 0
    %985 = vmatprep.subr.bf16.mxu0 0
    %986 = vmatpush1.bf16.xpose.msra.mxu0 0
    %987 = vmatprep.subr.bf16.mxu0 0
    %988 = vmatpush1.bf16.xpose.msra.mxu0 0
    %989 = vmatprep.subr.bf16.mxu0 0
    %990 = vmatpush1.bf16.xpose.msra.mxu0 0
    %991 = vmatprep.subr.bf16.mxu0 0
    %992 = vmatpush1.bf16.xpose.msra.mxu0 0
    %993 = vmatprep.subr.bf16.mxu0 0
    %994 = vmatpush1.bf16.xpose.msra.mxu0 0
    %995 = vmatprep.subr.bf16.mxu0 0
    %996 = vmatpush1.bf16.xpose.msra.mxu0 0
    %997 = vmatprep.subr.bf16.mxu0 0
    %998 = vmatpush1.bf16.xpose.msra.mxu0 0
    %999 = vmatprep.subr.bf16.mxu0 0
    %1000 = vmatpush1.bf16.xpose.msra.mxu0 0
    %1001 = vmatprep.subr.bf16.mxu0 0
    %1002 = vmatpush1.bf16.xpose.msra.mxu0 0
    %1003 = vmatprep.subr.bf16.mxu0 0
    %1004 = vmatpush1.bf16.xpose.msra.mxu0 0
    %1005 = vmatprep.mubr.bf16.mxu0 0
    %1006 = vmatmul.mubr.bf16.gmra.mrb[0].mxu0 %v968
    %v1007 = vpop.f32.mrb[0].mxu0
    %v1008 = vadd.f32 0.0, %v1007
    %v1009 = vpop.f32.mrb[0].mxu0
    %v1010 = vpop.f32.mrb[0].mxu0
    %v1011 = vpop.f32.mrb[0].mxu0
    %1012 = vdwg.mxu0
    %v1014 = vsel %vm920, %v898, 0
    %v1017 = vsel %vm920, %v906, 0
    %1019 = vmatprep.subr.bf16.mxu0 0
    %1020 = vmatpush1.bf16.xpose.msra.mxu0 %v1017
    %1021 = vmatprep.subr.bf16.mxu0 0
    %1022 = vmatpush1.bf16.xpose.msra.mxu0 0
    %1023 = vmatprep.subr.bf16.mxu0 0
    %1024 = vmatpush1.bf16.xpose.msra.mxu0 0
    %1025 = vmatprep.subr.bf16.mxu0 0
    %1026 = vmatpush1.bf16.xpose.msra.mxu0 0
    %1027 = vmatprep.subr.bf16.mxu0 0
    %1028 = vmatpush1.bf16.xpose.msra.mxu0 0
    %1029 = vmatprep.subr.bf16.mxu0 0
    %1030 = vmatpush1.bf16.xpose.msra.mxu0 0
    %1031 = vmatprep.subr.bf16.mxu0 0
    %1032 = vmatpush1.bf16.xpose.msra.mxu0 0
    %1033 = vmatprep.subr.bf16.mxu0 0
    %1034 = vmatpush1.bf16.xpose.msra.mxu0 0
    %1035 = vmatprep.subr.bf16.mxu0 0
    %1036 = vmatpush1.bf16.xpose.msra.mxu0 0
    %1037 = vmatprep.subr.bf16.mxu0 0
    %1038 = vmatpush1.bf16.xpose.msra.mxu0 0
    %1039 = vmatprep.subr.bf16.mxu0 0
    %1040 = vmatpush1.bf16.xpose.msra.mxu0 0
    %1041 = vmatprep.subr.bf16.mxu0 0
    %1042 = vmatpush1.bf16.xpose.msra.mxu0 0
    %1043 = vmatprep.subr.bf16.mxu0 0
    %1044 = vmatpush1.bf16.xpose.msra.mxu0 0
    %1045 = vmatprep.subr.bf16.mxu0 0
    %1046 = vmatpush1.bf16.xpose.msra.mxu0 0
    %1047 = vmatprep.subr.bf16.mxu0 0
    %1048 = vmatpush1.bf16.xpose.msra.mxu0 0
    %1049 = vmatprep.subr.bf16.mxu0 0
    %1050 = vmatpush1.bf16.xpose.msra.mxu0 0
    %1051 = vmatprep.mubr.bf16.mxu0 0
    %1052 = vmatmul.mubr.bf16.gmra.mrb[0].mxu0 %v1014
    %v1053 = vpop.f32.mrb[0].mxu0
    %v1054 = vadd.f32 0.0, %v1053
    %v1055 = vpop.f32.mrb[0].mxu0
    %v1056 = vpop.f32.mrb[0].mxu0
    %v1057 = vpop.f32.mrb[0].mxu0
    %1058 = vdwg.mxu0
    %v1060 = vsel %vm920, %v899, 0
    %v1063 = vsel %vm920, %v907, 0
    %1065 = vmatprep.subr.bf16.mxu0 0
    %1066 = vmatpush1.bf16.xpose.msra.mxu0 %v1063
    %1067 = vmatprep.subr.bf16.mxu0 0
    %1068 = vmatpush1.bf16.xpose.msra.mxu0 0
    %1069 = vmatprep.subr.bf16.mxu0 0
    %1070 = vmatpush1.bf16.xpose.msra.mxu0 0
    %1071 = vmatprep.subr.bf16.mxu0 0
    %1072 = vmatpush1.bf16.xpose.msra.mxu0 0
    %1073 = vmatprep.subr.bf16.mxu0 0
    %1074 = vmatpush1.bf16.xpose.msra.mxu0 0
    %1075 = vmatprep.subr.bf16.mxu0 0
    %1076 = vmatpush1.bf16.xpose.msra.mxu0 0
    %1077 = vmatprep.subr.bf16.mxu0 0
    %1078 = vmatpush1.bf16.xpose.msra.mxu0 0
    %1079 = vmatprep.subr.bf16.mxu0 0
    %1080 = vmatpush1.bf16.xpose.msra.mxu0 0
    %1081 = vmatprep.subr.bf16.mxu0 0
    %1082 = vmatpush1.bf16.xpose.msra.mxu0 0
    %1083 = vmatprep.subr.bf16.mxu0 0
    %1084 = vmatpush1.bf16.xpose.msra.mxu0 0
    %1085 = vmatprep.subr.bf16.mxu0 0
    %1086 = vmatpush1.bf16.xpose.msra.mxu0 0
    %1087 = vmatprep.subr.bf16.mxu0 0
    %1088 = vmatpush1.bf16.xpose.msra.mxu0 0
    %1089 = vmatprep.subr.bf16.mxu0 0
    %1090 = vmatpush1.bf16.xpose.msra.mxu0 0
    %1091 = vmatprep.subr.bf16.mxu0 0
    %1092 = vmatpush1.bf16.xpose.msra.mxu0 0
    %1093 = vmatprep.subr.bf16.mxu0 0
    %1094 = vmatpush1.bf16.xpose.msra.mxu0 0
    %1095 = vmatprep.subr.bf16.mxu0 0
    %1096 = vmatpush1.bf16.xpose.msra.mxu0 0
    %1097 = vmatprep.mubr.bf16.mxu0 0
    %1098 = vmatmul.mubr.bf16.gmra.mrb[0].mxu0 %v1060
    %v1099 = vpop.f32.mrb[0].mxu0
    %v1100 = vadd.f32 0.0, %v1099
    %v1101 = vpop.f32.mrb[0].mxu0
    %v1102 = vpop.f32.mrb[0].mxu0
    %v1103 = vpop.f32.mrb[0].mxu0
    %1104 = vdwg.mxu0
    %v1106 = vsel %vm920, %v900, 0
    %v1109 = vsel %vm920, %v908, 0
    %1111 = vmatprep.subr.bf16.mxu0 0
    %1112 = vmatpush1.bf16.xpose.msra.mxu0 %v1109
    %1113 = vmatprep.subr.bf16.mxu0 0
    %1114 = vmatpush1.bf16.xpose.msra.mxu0 0
    %1115 = vmatprep.subr.bf16.mxu0 0
    %1116 = vmatpush1.bf16.xpose.msra.mxu0 0
    %1117 = vmatprep.subr.bf16.mxu0 0
    %1118 = vmatpush1.bf16.xpose.msra.mxu0 0
    %1119 = vmatprep.subr.bf16.mxu0 0
    %1120 = vmatpush1.bf16.xpose.msra.mxu0 0
    %1121 = vmatprep.subr.bf16.mxu0 0
    %1122 = vmatpush1.bf16.xpose.msra.mxu0 0
    %1123 = vmatprep.subr.bf16.mxu0 0
    %1124 = vmatpush1.bf16.xpose.msra.mxu0 0
    %1125 = vmatprep.subr.bf16.mxu0 0
    %1126 = vmatpush1.bf16.xpose.msra.mxu0 0
    %1127 = vmatprep.subr.bf16.mxu0 0
    %1128 = vmatpush1.bf16.xpose.msra.mxu0 0
    %1129 = vmatprep.subr.bf16.mxu0 0
    %1130 = vmatpush1.bf16.xpose.msra.mxu0 0
    %1131 = vmatprep.subr.bf16.mxu0 0
    %1132 = vmatpush1.bf16.xpose.msra.mxu0 0
    %1133 = vmatprep.subr.bf16.mxu0 0
    %1134 = vmatpush1.bf16.xpose.msra.mxu0 0
    %1135 = vmatprep.subr.bf16.mxu0 0
    %1136 = vmatpush1.bf16.xpose.msra.mxu0 0
    %1137 = vmatprep.subr.bf16.mxu0 0
    %1138 = vmatpush1.bf16.xpose.msra.mxu0 0
    %1139 = vmatprep.subr.bf16.mxu0 0
    %1140 = vmatpush1.bf16.xpose.msra.mxu0 0
    %1141 = vmatprep.subr.bf16.mxu0 0
    %1142 = vmatpush1.bf16.xpose.msra.mxu0 0
    %1143 = vmatprep.mubr.bf16.mxu0 0
    %1144 = vmatmul.mubr.bf16.gmra.mrb[0].mxu0 %v1106
    %v1145 = vpop.f32.mrb[0].mxu0
    %v1146 = vadd.f32 0.0, %v1145
    %v1147 = vpop.f32.mrb[0].mxu0
    %v1148 = vpop.f32.mrb[0].mxu0
    %v1149 = vpop.f32.mrb[0].mxu0
    %1150 = vdwg.mxu0
    %v1152 = vsel %vm920, %v901, 0
    %v1155 = vsel %vm920, %v909, 0
    %1157 = vmatprep.subr.bf16.mxu0 0
    %1158 = vmatpush1.bf16.xpose.msra.mxu0 %v1155
    %1159 = vmatprep.subr.bf16.mxu0 0
    %1160 = vmatpush1.bf16.xpose.msra.mxu0 0
    %1161 = vmatprep.subr.bf16.mxu0 0
    %1162 = vmatpush1.bf16.xpose.msra.mxu0 0
    %1163 = vmatprep.subr.bf16.mxu0 0
    %1164 = vmatpush1.bf16.xpose.msra.mxu0 0
    %1165 = vmatprep.subr.bf16.mxu0 0
    %1166 = vmatpush1.bf16.xpose.msra.mxu0 0
    %1167 = vmatprep.subr.bf16.mxu0 0
    %1168 = vmatpush1.bf16.xpose.msra.mxu0 0
    %1169 = vmatprep.subr.bf16.mxu0 0
    %1170 = vmatpush1.bf16.xpose.msra.mxu0 0
    %1171 = vmatprep.subr.bf16.mxu0 0
    %1172 = vmatpush1.bf16.xpose.msra.mxu0 0
    %1173 = vmatprep.subr.bf16.mxu0 0
    %1174 = vmatpush1.bf16.xpose.msra.mxu0 0
    %1175 = vmatprep.subr.bf16.mxu0 0
    %1176 = vmatpush1.bf16.xpose.msra.mxu0 0
    %1177 = vmatprep.subr.bf16.mxu0 0
    %1178 = vmatpush1.bf16.xpose.msra.mxu0 0
    %1179 = vmatprep.subr.bf16.mxu0 0
    %1180 = vmatpush1.bf16.xpose.msra.mxu0 0
    %1181 = vmatprep.subr.bf16.mxu0 0
    %1182 = vmatpush1.bf16.xpose.msra.mxu0 0
    %1183 = vmatprep.subr.bf16.mxu0 0
    %1184 = vmatpush1.bf16.xpose.msra.mxu0 0
    %1185 = vmatprep.subr.bf16.mxu0 0
    %1186 = vmatpush1.bf16.xpose.msra.mxu0 0
    %1187 = vmatprep.subr.bf16.mxu0 0
    %1188 = vmatpush1.bf16.xpose.msra.mxu0 0
    %1189 = vmatprep.mubr.bf16.mxu0 0
    %1190 = vmatmul.mubr.bf16.gmra.mrb[0].mxu0 %v1152
    %v1191 = vpop.f32.mrb[0].mxu0
    %v1192 = vadd.f32 0.0, %v1191
    %v1193 = vpop.f32.mrb[0].mxu0
    %v1194 = vpop.f32.mrb[0].mxu0
    %v1195 = vpop.f32.mrb[0].mxu0
    %1196 = vdwg.mxu0
    %v1198 = vsel %vm920, %v902, 0
    %v1201 = vsel %vm920, %v910, 0
    %1203 = vmatprep.subr.bf16.mxu0 0
    %1204 = vmatpush1.bf16.xpose.msra.mxu0 %v1201
    %1205 = vmatprep.subr.bf16.mxu0 0
    %1206 = vmatpush1.bf16.xpose.msra.mxu0 0
    %1207 = vmatprep.subr.bf16.mxu0 0
    %1208 = vmatpush1.bf16.xpose.msra.mxu0 0
    %1209 = vmatprep.subr.bf16.mxu0 0
    %1210 = vmatpush1.bf16.xpose.msra.mxu0 0
    %1211 = vmatprep.subr.bf16.mxu0 0
    %1212 = vmatpush1.bf16.xpose.msra.mxu0 0
    %1213 = vmatprep.subr.bf16.mxu0 0
    %1214 = vmatpush1.bf16.xpose.msra.mxu0 0
    %1215 = vmatprep.subr.bf16.mxu0 0
    %1216 = vmatpush1.bf16.xpose.msra.mxu0 0
    %1217 = vmatprep.subr.bf16.mxu0 0
    %1218 = vmatpush1.bf16.xpose.msra.mxu0 0
    %1219 = vmatprep.subr.bf16.mxu0 0
    %1220 = vmatpush1.bf16.xpose.msra.mxu0 0
    %1221 = vmatprep.subr.bf16.mxu0 0
    %1222 = vmatpush1.bf16.xpose.msra.mxu0 0
    %1223 = vmatprep.subr.bf16.mxu0 0
    %1224 = vmatpush1.bf16.xpose.msra.mxu0 0
    %1225 = vmatprep.subr.bf16.mxu0 0
    %1226 = vmatpush1.bf16.xpose.msra.mxu0 0
    %1227 = vmatprep.subr.bf16.mxu0 0
    %1228 = vmatpush1.bf16.xpose.msra.mxu0 0
    %1229 = vmatprep.subr.bf16.mxu0 0
    %1230 = vmatpush1.bf16.xpose.msra.mxu0 0
    %1231 = vmatprep.subr.bf16.mxu0 0
    %1232 = vmatpush1.bf16.xpose.msra.mxu0 0
    %1233 = vmatprep.subr.bf16.mxu0 0
    %1234 = vmatpush1.bf16.xpose.msra.mxu0 0
    %1235 = vmatprep.mubr.bf16.mxu0 0
    %1236 = vmatmul.mubr.bf16.gmra.mrb[0].mxu0 %v1198
    %v1237 = vpop.f32.mrb[0].mxu0
    %v1238 = vadd.f32 0.0, %v1237
    %v1239 = vpop.f32.mrb[0].mxu0
    %v1240 = vpop.f32.mrb[0].mxu0
    %v1241 = vpop.f32.mrb[0].mxu0
    %1242 = vdwg.mxu0
    %v1244 = vsel %vm920, %v903, 0
    %v1247 = vsel %vm920, %v911, 0
    %1249 = vmatprep.subr.bf16.mxu0 0
    %1250 = vmatpush1.bf16.xpose.msra.mxu0 %v1247
    %1251 = vmatprep.subr.bf16.mxu0 0
    %1252 = vmatpush1.bf16.xpose.msra.mxu0 0
    %1253 = vmatprep.subr.bf16.mxu0 0
    %1254 = vmatpush1.bf16.xpose.msra.mxu0 0
    %1255 = vmatprep.subr.bf16.mxu0 0
    %1256 = vmatpush1.bf16.xpose.msra.mxu0 0
    %1257 = vmatprep.subr.bf16.mxu0 0
    %1258 = vmatpush1.bf16.xpose.msra.mxu0 0
    %1259 = vmatprep.subr.bf16.mxu0 0
    %1260 = vmatpush1.bf16.xpose.msra.mxu0 0
    %1261 = vmatprep.subr.bf16.mxu0 0
    %1262 = vmatpush1.bf16.xpose.msra.mxu0 0
    %1263 = vmatprep.subr.bf16.mxu0 0
    %1264 = vmatpush1.bf16.xpose.msra.mxu0 0
    %1265 = vmatprep.subr.bf16.mxu0 0
    %1266 = vmatpush1.bf16.xpose.msra.mxu0 0
    %1267 = vmatprep.subr.bf16.mxu0 0
    %1268 = vmatpush1.bf16.xpose.msra.mxu0 0
    %1269 = vmatprep.subr.bf16.mxu0 0
    %1270 = vmatpush1.bf16.xpose.msra.mxu0 0
    %1271 = vmatprep.subr.bf16.mxu0 0
    %1272 = vmatpush1.bf16.xpose.msra.mxu0 0
    %1273 = vmatprep.subr.bf16.mxu0 0
    %1274 = vmatpush1.bf16.xpose.msra.mxu0 0
    %1275 = vmatprep.subr.bf16.mxu0 0
    %1276 = vmatpush1.bf16.xpose.msra.mxu0 0
    %1277 = vmatprep.subr.bf16.mxu0 0
    %1278 = vmatpush1.bf16.xpose.msra.mxu0 0
    %1279 = vmatprep.subr.bf16.mxu0 0
    %1280 = vmatpush1.bf16.xpose.msra.mxu0 0
    %1281 = vmatprep.mubr.bf16.mxu0 0
    %1282 = vmatmul.mubr.bf16.gmra.mrb[0].mxu0 %v1244
    %v1283 = vpop.f32.mrb[0].mxu0
    %v1284 = vadd.f32 0.0, %v1283
    %v1285 = vpop.f32.mrb[0].mxu0
    %v1286 = vpop.f32.mrb[0].mxu0
    %v1287 = vpop.f32.mrb[0].mxu0
    %1288 = vdwg.mxu0
    %v1289 = vmul.f32 %v962, 0.35355338
    %v1290 = vmul.f32 %v1008, 0.35355338
    %v1291 = vmul.f32 %v1054, 0.35355338
    %v1292 = vmul.f32 %v1100, 0.35355338
    %v1293 = vmul.f32 %v1146, 0.35355338
    %v1294 = vmul.f32 %v1192, 0.35355338
    %v1295 = vmul.f32 %v1238, 0.35355338
    %v1296 = vmul.f32 %v1284, 0.35355338
    %v1297 = vsel %vm920, %v1289, -inf
    %1298 = vmax.xlane.f32.xlu0 %v1297
    %v1299 = vpop.xlane.xlu0 %1298
    %v1300 = vsel %vm920, %v1290, -inf
    %1301 = vmax.xlane.f32.xlu0 %v1300
    %v1302 = vpop.xlane.xlu0 %1301
    %v1303 = vsel %vm920, %v1291, -inf
    %1304 = vmax.xlane.f32.xlu0 %v1303
    %v1305 = vpop.xlane.xlu0 %1304
    %v1306 = vsel %vm920, %v1292, -inf
    %1307 = vmax.xlane.f32.xlu0 %v1306
    %v1308 = vpop.xlane.xlu0 %1307
    %v1309 = vsel %vm920, %v1293, -inf
    %1310 = vmax.xlane.f32.xlu0 %v1309
    %v1311 = vpop.xlane.xlu0 %1310
    %v1312 = vsel %vm920, %v1294, -inf
    %1313 = vmax.xlane.f32.xlu0 %v1312
    %v1314 = vpop.xlane.xlu0 %1313
    %v1315 = vsel %vm920, %v1295, -inf
    %1316 = vmax.xlane.f32.xlu0 %v1315
    %v1317 = vpop.xlane.xlu0 %1316
    %v1318 = vsel %vm920, %v1296, -inf
    %1319 = vmax.xlane.f32.xlu0 %v1318
    %v1320 = vpop.xlane.xlu0 %1319
    %v1321 = vsub.f32 %v1289, %v1299
    %v1322 = vsub.f32 %v1290, %v1302
    %v1323 = vsub.f32 %v1291, %v1305
    %v1324 = vsub.f32 %v1292, %v1308
    %v1325 = vsub.f32 %v1293, %v1311
    %v1326 = vsub.f32 %v1294, %v1314
    %v1327 = vsub.f32 %v1295, %v1317
    %v1328 = vsub.f32 %v1296, %v1320
    %v1329 = vmul.f32 %v1321, 1.442695
    %v1330 = vpow.pop %v1329
    %v1331 = vmul.f32 %v1322, 1.442695
    %v1332 = vpow.pop %v1331
    %v1333 = vmul.f32 %v1323, 1.442695
    %v1334 = vpow.pop %v1333
    %v1335 = vmul.f32 %v1324, 1.442695
    %v1336 = vpow.pop %v1335
    %v1337 = vmul.f32 %v1325, 1.442695
    %v1338 = vpow.pop %v1337
    %v1339 = vmul.f32 %v1326, 1.442695
    %v1340 = vpow.pop %v1339
    %v1341 = vmul.f32 %v1327, 1.442695
    %v1342 = vpow.pop %v1341
    %v1343 = vmul.f32 %v1328, 1.442695
    %v1344 = vpow.pop %v1343
    %v1345 = vsel %vm920, %v1330, 0.0
    %1346 = vadd.xlane.f32.xlu0 %v1345
    %v1347 = vpop.xlane.xlu0 %1346
    %v1348 = vsel %vm920, %v1332, 0.0
    %1349 = vadd.xlane.f32.xlu0 %v1348
    %v1350 = vpop.xlane.xlu0 %1349
    %v1351 = vsel %vm920, %v1334, 0.0
    %1352 = vadd.xlane.f32.xlu0 %v1351
    %v1353 = vpop.xlane.xlu0 %1352
    %v1354 = vsel %vm920, %v1336, 0.0
    %1355 = vadd.xlane.f32.xlu0 %v1354
    %v1356 = vpop.xlane.xlu0 %1355
    %v1357 = vsel %vm920, %v1338, 0.0
    %1358 = vadd.xlane.f32.xlu0 %v1357
    %v1359 = vpop.xlane.xlu0 %1358
    %v1360 = vsel %vm920, %v1340, 0.0
    %1361 = vadd.xlane.f32.xlu0 %v1360
    %v1362 = vpop.xlane.xlu0 %1361
    %v1363 = vsel %vm920, %v1342, 0.0
    %1364 = vadd.xlane.f32.xlu0 %v1363
    %v1365 = vpop.xlane.xlu0 %1364
    %v1366 = vsel %vm920, %v1344, 0.0
    %1367 = vadd.xlane.f32.xlu0 %v1366
    %v1368 = vpop.xlane.xlu0 %1367
    %v1369 = vrcp.pop %v1347
    %v1370 = vrcp.pop %v1350
    %v1371 = vrcp.pop %v1353
    %v1372 = vrcp.pop %v1356
    %v1373 = vrcp.pop %v1359
    %v1374 = vrcp.pop %v1362
    %v1375 = vrcp.pop %v1365
    %v1376 = vrcp.pop %v1368
    %v1377 = vmul.f32 %v1330, %v1369
    %v1378 = vmul.f32 %v1332, %v1370
    %v1379 = vmul.f32 %v1334, %v1371
    %v1380 = vmul.f32 %v1336, %v1372
    %v1381 = vmul.f32 %v1338, %v1373
    %v1382 = vmul.f32 %v1340, %v1374
    %v1383 = vmul.f32 %v1342, %v1375
    %v1384 = vmul.f32 %v1344, %v1376
    %v1385 = vpack.c.bf16 %v1377, %v1377
    %v1386 = vpack.c.bf16 %v1378, %v1378
    %v1387 = vpack.c.bf16 %v1379, %v1379
    %v1388 = vpack.c.bf16 %v1380, %v1380
    %v1389 = vpack.c.bf16 %v1381, %v1381
    %v1390 = vpack.c.bf16 %v1382, %v1382
    %v1391 = vpack.c.bf16 %v1383, %v1383
    %v1392 = vpack.c.bf16 %v1384, %v1384
    %v1394 = vsel %vm920, %v1385, 0
    %vm1396 = vcmask 1043456
    %v1398 = vsel %vm1396, %v912, 0
    %1400 = vmatprep.subr.bf16.mxu0 0
    %1401 = vmatpush1.bf16.msra.mxu0 %v1398
    %1402 = vmatprep.subr.bf16.mxu0 0
    %1403 = vmatpush1.bf16.msra.mxu0 0
    %1404 = vmatprep.subr.bf16.mxu0 0
    %1405 = vmatpush1.bf16.msra.mxu0 0
    %1406 = vmatprep.subr.bf16.mxu0 0
    %1407 = vmatpush1.bf16.msra.mxu0 0
    %1408 = vmatprep.subr.bf16.mxu0 0
    %1409 = vmatpush1.bf16.msra.mxu0 0
    %1410 = vmatprep.subr.bf16.mxu0 0
    %1411 = vmatpush1.bf16.msra.mxu0 0
    %1412 = vmatprep.subr.bf16.mxu0 0
    %1413 = vmatpush1.bf16.msra.mxu0 0
    %1414 = vmatprep.subr.bf16.mxu0 0
    %1415 = vmatpush1.bf16.msra.mxu0 0
    %1416 = vmatprep.subr.bf16.mxu0 0
    %1417 = vmatpush1.bf16.msra.mxu0 0
    %1418 = vmatprep.subr.bf16.mxu0 0
    %1419 = vmatpush1.bf16.msra.mxu0 0
    %1420 = vmatprep.subr.bf16.mxu0 0
    %1421 = vmatpush1.bf16.msra.mxu0 0
    %1422 = vmatprep.subr.bf16.mxu0 0
    %1423 = vmatpush1.bf16.msra.mxu0 0
    %1424 = vmatprep.subr.bf16.mxu0 0
    %1425 = vmatpush1.bf16.msra.mxu0 0
    %1426 = vmatprep.subr.bf16.mxu0 0
    %1427 = vmatpush1.bf16.msra.mxu0 0
    %1428 = vmatprep.subr.bf16.mxu0 0
    %1429 = vmatpush1.bf16.msra.mxu0 0
    %1430 = vmatprep.subr.bf16.mxu0 0
    %1431 = vmatpush1.bf16.msra.mxu0 0
    %1432 = vmatprep.mubr.bf16.mxu0 0
    %1433 = vmatmul.mubr.bf16.gmra.mrb[0].mxu0 %v1394
    %v1434 = vpop.f32.mrb[0].mxu0
    %v1435 = vadd.f32 0.0, %v1434
    %v1436 = vpop.f32.mrb[0].mxu0
    %v1437 = vpop.f32.mrb[0].mxu0
    %v1438 = vpop.f32.mrb[0].mxu0
    %1439 = vdwg.mxu0
    %v1441 = vsel %vm920, %v1386, 0
    %v1444 = vsel %vm1396, %v913, 0
    %1446 = vmatprep.subr.bf16.mxu0 0
    %1447 = vmatpush1.bf16.msra.mxu0 %v1444
    %1448 = vmatprep.subr.bf16.mxu0 0
    %1449 = vmatpush1.bf16.msra.mxu0 0
    %1450 = vmatprep.subr.bf16.mxu0 0
    %1451 = vmatpush1.bf16.msra.mxu0 0
    %1452 = vmatprep.subr.bf16.mxu0 0
    %1453 = vmatpush1.bf16.msra.mxu0 0
    %1454 = vmatprep.subr.bf16.mxu0 0
    %1455 = vmatpush1.bf16.msra.mxu0 0
    %1456 = vmatprep.subr.bf16.mxu0 0
    %1457 = vmatpush1.bf16.msra.mxu0 0
    %1458 = vmatprep.subr.bf16.mxu0 0
    %1459 = vmatpush1.bf16.msra.mxu0 0
    %1460 = vmatprep.subr.bf16.mxu0 0
    %1461 = vmatpush1.bf16.msra.mxu0 0
    %1462 = vmatprep.subr.bf16.mxu0 0
    %1463 = vmatpush1.bf16.msra.mxu0 0
    %1464 = vmatprep.subr.bf16.mxu0 0
    %1465 = vmatpush1.bf16.msra.mxu0 0
    %1466 = vmatprep.subr.bf16.mxu0 0
    %1467 = vmatpush1.bf16.msra.mxu0 0
    %1468 = vmatprep.subr.bf16.mxu0 0
    %1469 = vmatpush1.bf16.msra.mxu0 0
    %1470 = vmatprep.subr.bf16.mxu0 0
    %1471 = vmatpush1.bf16.msra.mxu0 0
    %1472 = vmatprep.subr.bf16.mxu0 0
    %1473 = vmatpush1.bf16.msra.mxu0 0
    %1474 = vmatprep.subr.bf16.mxu0 0
    %1475 = vmatpush1.bf16.msra.mxu0 0
    %1476 = vmatprep.subr.bf16.mxu0 0
    %1477 = vmatpush1.bf16.msra.mxu0 0
    %1478 = vmatprep.mubr.bf16.mxu0 0
    %1479 = vmatmul.mubr.bf16.gmra.mrb[0].mxu0 %v1441
    %v1480 = vpop.f32.mrb[0].mxu0
    %v1481 = vadd.f32 0.0, %v1480
    %v1482 = vpop.f32.mrb[0].mxu0
    %v1483 = vpop.f32.mrb[0].mxu0
    %v1484 = vpop.f32.mrb[0].mxu0
    %1485 = vdwg.mxu0
    %v1487 = vsel %vm920, %v1387, 0
    %v1490 = vsel %vm1396, %v914, 0
    %1492 = vmatprep.subr.bf16.mxu0 0
    %1493 = vmatpush1.bf16.msra.mxu0 %v1490
    %1494 = vmatprep.subr.bf16.mxu0 0
    %1495 = vmatpush1.bf16.msra.mxu0 0
    %1496 = vmatprep.subr.bf16.mxu0 0
    %1497 = vmatpush1.bf16.msra.mxu0 0
    %1498 = vmatprep.subr.bf16.mxu0 0
    %1499 = vmatpush1.bf16.msra.mxu0 0
    %1500 = vmatprep.subr.bf16.mxu0 0
    %1501 = vmatpush1.bf16.msra.mxu0 0
    %1502 = vmatprep.subr.bf16.mxu0 0
    %1503 = vmatpush1.bf16.msra.mxu0 0
    %1504 = vmatprep.subr.bf16.mxu0 0
    %1505 = vmatpush1.bf16.msra.mxu0 0
    %1506 = vmatprep.subr.bf16.mxu0 0
    %1507 = vmatpush1.bf16.msra.mxu0 0
    %1508 = vmatprep.subr.bf16.mxu0 0
    %1509 = vmatpush1.bf16.msra.mxu0 0
    %1510 = vmatprep.subr.bf16.mxu0 0
    %1511 = vmatpush1.bf16.msra.mxu0 0
    %1512 = vmatprep.subr.bf16.mxu0 0
    %1513 = vmatpush1.bf16.msra.mxu0 0
    %1514 = vmatprep.subr.bf16.mxu0 0
    %1515 = vmatpush1.bf16.msra.mxu0 0
    %1516 = vmatprep.subr.bf16.mxu0 0
    %1517 = vmatpush1.bf16.msra.mxu0 0
    %1518 = vmatprep.subr.bf16.mxu0 0
    %1519 = vmatpush1.bf16.msra.mxu0 0
    %1520 = vmatprep.subr.bf16.mxu0 0
    %1521 = vmatpush1.bf16.msra.mxu0 0
    %1522 = vmatprep.subr.bf16.mxu0 0
    %1523 = vmatpush1.bf16.msra.mxu0 0
    %1524 = vmatprep.mubr.bf16.mxu0 0
    %1525 = vmatmul.mubr.bf16.gmra.mrb[0].mxu0 %v1487
    %v1526 = vpop.f32.mrb[0].mxu0
    %v1527 = vadd.f32 0.0, %v1526
    %v1528 = vpop.f32.mrb[0].mxu0
    %v1529 = vpop.f32.mrb[0].mxu0
    %v1530 = vpop.f32.mrb[0].mxu0
    %1531 = vdwg.mxu0
    %v1533 = vsel %vm920, %v1388, 0
    %v1536 = vsel %vm1396, %v915, 0
    %1538 = vmatprep.subr.bf16.mxu0 0
    %1539 = vmatpush1.bf16.msra.mxu0 %v1536
    %1540 = vmatprep.subr.bf16.mxu0 0
    %1541 = vmatpush1.bf16.msra.mxu0 0
    %1542 = vmatprep.subr.bf16.mxu0 0
    %1543 = vmatpush1.bf16.msra.mxu0 0
    %1544 = vmatprep.subr.bf16.mxu0 0
    %1545 = vmatpush1.bf16.msra.mxu0 0
    %1546 = vmatprep.subr.bf16.mxu0 0
    %1547 = vmatpush1.bf16.msra.mxu0 0
    %1548 = vmatprep.subr.bf16.mxu0 0
    %1549 = vmatpush1.bf16.msra.mxu0 0
    %1550 = vmatprep.subr.bf16.mxu0 0
    %1551 = vmatpush1.bf16.msra.mxu0 0
    %1552 = vmatprep.subr.bf16.mxu0 0
    %1553 = vmatpush1.bf16.msra.mxu0 0
    %1554 = vmatprep.subr.bf16.mxu0 0
    %1555 = vmatpush1.bf16.msra.mxu0 0
    %1556 = vmatprep.subr.bf16.mxu0 0
    %1557 = vmatpush1.bf16.msra.mxu0 0
    %1558 = vmatprep.subr.bf16.mxu0 0
    %1559 = vmatpush1.bf16.msra.mxu0 0
    %1560 = vmatprep.subr.bf16.mxu0 0
    %1561 = vmatpush1.bf16.msra.mxu0 0
    %1562 = vmatprep.subr.bf16.mxu0 0
    %1563 = vmatpush1.bf16.msra.mxu0 0
    %1564 = vmatprep.subr.bf16.mxu0 0
    %1565 = vmatpush1.bf16.msra.mxu0 0
    %1566 = vmatprep.subr.bf16.mxu0 0
    %1567 = vmatpush1.bf16.msra.mxu0 0
    %1568 = vmatprep.subr.bf16.mxu0 0
    %1569 = vmatpush1.bf16.msra.mxu0 0
    %1570 = vmatprep.mubr.bf16.mxu0 0
    %1571 = vmatmul.mubr.bf16.gmra.mrb[0].mxu0 %v1533
    %v1572 = vpop.f32.mrb[0].mxu0
    %v1573 = vadd.f32 0.0, %v1572
    %v1574 = vpop.f32.mrb[0].mxu0
    %v1575 = vpop.f32.mrb[0].mxu0
    %v1576 = vpop.f32.mrb[0].mxu0
    %1577 = vdwg.mxu0
    %v1579 = vsel %vm920, %v1389, 0
    %v1582 = vsel %vm1396, %v916, 0
    %1584 = vmatprep.subr.bf16.mxu0 0
    %1585 = vmatpush1.bf16.msra.mxu0 %v1582
    %1586 = vmatprep.subr.bf16.mxu0 0
    %1587 = vmatpush1.bf16.msra.mxu0 0
    %1588 = vmatprep.subr.bf16.mxu0 0
    %1589 = vmatpush1.bf16.msra.mxu0 0
    %1590 = vmatprep.subr.bf16.mxu0 0
    %1591 = vmatpush1.bf16.msra.mxu0 0
    %1592 = vmatprep.subr.bf16.mxu0 0
    %1593 = vmatpush1.bf16.msra.mxu0 0
    %1594 = vmatprep.subr.bf16.mxu0 0
    %1595 = vmatpush1.bf16.msra.mxu0 0
    %1596 = vmatprep.subr.bf16.mxu0 0
    %1597 = vmatpush1.bf16.msra.mxu0 0
    %1598 = vmatprep.subr.bf16.mxu0 0
    %1599 = vmatpush1.bf16.msra.mxu0 0
    %1600 = vmatprep.subr.bf16.mxu0 0
    %1601 = vmatpush1.bf16.msra.mxu0 0
    %1602 = vmatprep.subr.bf16.mxu0 0
    %1603 = vmatpush1.bf16.msra.mxu0 0
    %1604 = vmatprep.subr.bf16.mxu0 0
    %1605 = vmatpush1.bf16.msra.mxu0 0
    %1606 = vmatprep.subr.bf16.mxu0 0
    %1607 = vmatpush1.bf16.msra.mxu0 0
    %1608 = vmatprep.subr.bf16.mxu0 0
    %1609 = vmatpush1.bf16.msra.mxu0 0
    %1610 = vmatprep.subr.bf16.mxu0 0
    %1611 = vmatpush1.bf16.msra.mxu0 0
    %1612 = vmatprep.subr.bf16.mxu0 0
    %1613 = vmatpush1.bf16.msra.mxu0 0
    %1614 = vmatprep.subr.bf16.mxu0 0
    %1615 = vmatpush1.bf16.msra.mxu0 0
    %1616 = vmatprep.mubr.bf16.mxu0 0
    %1617 = vmatmul.mubr.bf16.gmra.mrb[0].mxu0 %v1579
    %v1618 = vpop.f32.mrb[0].mxu0
    %v1619 = vadd.f32 0.0, %v1618
    %v1620 = vpop.f32.mrb[0].mxu0
    %v1621 = vpop.f32.mrb[0].mxu0
    %v1622 = vpop.f32.mrb[0].mxu0
    %1623 = vdwg.mxu0
    %v1625 = vsel %vm920, %v1390, 0
    %v1628 = vsel %vm1396, %v917, 0
    %1630 = vmatprep.subr.bf16.mxu0 0
    %1631 = vmatpush1.bf16.msra.mxu0 %v1628
    %1632 = vmatprep.subr.bf16.mxu0 0
    %1633 = vmatpush1.bf16.msra.mxu0 0
    %1634 = vmatprep.subr.bf16.mxu0 0
    %1635 = vmatpush1.bf16.msra.mxu0 0
    %1636 = vmatprep.subr.bf16.mxu0 0
    %1637 = vmatpush1.bf16.msra.mxu0 0
    %1638 = vmatprep.subr.bf16.mxu0 0
    %1639 = vmatpush1.bf16.msra.mxu0 0
    %1640 = vmatprep.subr.bf16.mxu0 0
    %1641 = vmatpush1.bf16.msra.mxu0 0
    %1642 = vmatprep.subr.bf16.mxu0 0
    %1643 = vmatpush1.bf16.msra.mxu0 0
    %1644 = vmatprep.subr.bf16.mxu0 0
    %1645 = vmatpush1.bf16.msra.mxu0 0
    %1646 = vmatprep.subr.bf16.mxu0 0
    %1647 = vmatpush1.bf16.msra.mxu0 0
    %1648 = vmatprep.subr.bf16.mxu0 0
    %1649 = vmatpush1.bf16.msra.mxu0 0
    %1650 = vmatprep.subr.bf16.mxu0 0
    %1651 = vmatpush1.bf16.msra.mxu0 0
    %1652 = vmatprep.subr.bf16.mxu0 0
    %1653 = vmatpush1.bf16.msra.mxu0 0
    %1654 = vmatprep.subr.bf16.mxu0 0
    %1655 = vmatpush1.bf16.msra.mxu0 0
    %1656 = vmatprep.subr.bf16.mxu0 0
    %1657 = vmatpush1.bf16.msra.mxu0 0
    %1658 = vmatprep.subr.bf16.mxu0 0
    %1659 = vmatpush1.bf16.msra.mxu0 0
    %1660 = vmatprep.subr.bf16.mxu0 0
    %1661 = vmatpush1.bf16.msra.mxu0 0
    %1662 = vmatprep.mubr.bf16.mxu0 0
    %1663 = vmatmul.mubr.bf16.gmra.mrb[0].mxu0 %v1625
    %v1664 = vpop.f32.mrb[0].mxu0
    %v1665 = vadd.f32 0.0, %v1664
    %v1666 = vpop.f32.mrb[0].mxu0
    %v1667 = vpop.f32.mrb[0].mxu0
    %v1668 = vpop.f32.mrb[0].mxu0
    %1669 = vdwg.mxu0
    %v1671 = vsel %vm920, %v1391, 0
    %v1674 = vsel %vm1396, %v918, 0
    %1676 = vmatprep.subr.bf16.mxu0 0
    %1677 = vmatpush1.bf16.msra.mxu0 %v1674
    %1678 = vmatprep.subr.bf16.mxu0 0
    %1679 = vmatpush1.bf16.msra.mxu0 0
    %1680 = vmatprep.subr.bf16.mxu0 0
    %1681 = vmatpush1.bf16.msra.mxu0 0
    %1682 = vmatprep.subr.bf16.mxu0 0
    %1683 = vmatpush1.bf16.msra.mxu0 0
    %1684 = vmatprep.subr.bf16.mxu0 0
    %1685 = vmatpush1.bf16.msra.mxu0 0
    %1686 = vmatprep.subr.bf16.mxu0 0
    %1687 = vmatpush1.bf16.msra.mxu0 0
    %1688 = vmatprep.subr.bf16.mxu0 0
    %1689 = vmatpush1.bf16.msra.mxu0 0
    %1690 = vmatprep.subr.bf16.mxu0 0
    %1691 = vmatpush1.bf16.msra.mxu0 0
    %1692 = vmatprep.subr.bf16.mxu0 0
    %1693 = vmatpush1.bf16.msra.mxu0 0
    %1694 = vmatprep.subr.bf16.mxu0 0
    %1695 = vmatpush1.bf16.msra.mxu0 0
    %1696 = vmatprep.subr.bf16.mxu0 0
    %1697 = vmatpush1.bf16.msra.mxu0 0
    %1698 = vmatprep.subr.bf16.mxu0 0
    %1699 = vmatpush1.bf16.msra.mxu0 0
    %1700 = vmatprep.subr.bf16.mxu0 0
    %1701 = vmatpush1.bf16.msra.mxu0 0
    %1702 = vmatprep.subr.bf16.mxu0 0
    %1703 = vmatpush1.bf16.msra.mxu0 0
    %1704 = vmatprep.subr.bf16.mxu0 0
    %1705 = vmatpush1.bf16.msra.mxu0 0
    %1706 = vmatprep.subr.bf16.mxu0 0
    %1707 = vmatpush1.bf16.msra.mxu0 0
    %1708 = vmatprep.mubr.bf16.mxu0 0
    %1709 = vmatmul.mubr.bf16.gmra.mrb[0].mxu0 %v1671
    %v1710 = vpop.f32.mrb[0].mxu0
    %v1711 = vadd.f32 0.0, %v1710
    %v1712 = vpop.f32.mrb[0].mxu0
    %v1713 = vpop.f32.mrb[0].mxu0
    %v1714 = vpop.f32.mrb[0].mxu0
    %1715 = vdwg.mxu0
    %v1717 = vsel %vm920, %v1392, 0
    %v1720 = vsel %vm1396, %v919, 0
    %1722 = vmatprep.subr.bf16.mxu0 0
    %1723 = vmatpush1.bf16.msra.mxu0 %v1720
    %1724 = vmatprep.subr.bf16.mxu0 0
    %1725 = vmatpush1.bf16.msra.mxu0 0
    %1726 = vmatprep.subr.bf16.mxu0 0
    %1727 = vmatpush1.bf16.msra.mxu0 0
    %1728 = vmatprep.subr.bf16.mxu0 0
    %1729 = vmatpush1.bf16.msra.mxu0 0
    %1730 = vmatprep.subr.bf16.mxu0 0
    %1731 = vmatpush1.bf16.msra.mxu0 0
    %1732 = vmatprep.subr.bf16.mxu0 0
    %1733 = vmatpush1.bf16.msra.mxu0 0
    %1734 = vmatprep.subr.bf16.mxu0 0
    %1735 = vmatpush1.bf16.msra.mxu0 0
    %1736 = vmatprep.subr.bf16.mxu0 0
    %1737 = vmatpush1.bf16.msra.mxu0 0
    %1738 = vmatprep.subr.bf16.mxu0 0
    %1739 = vmatpush1.bf16.msra.mxu0 0
    %1740 = vmatprep.subr.bf16.mxu0 0
    %1741 = vmatpush1.bf16.msra.mxu0 0
    %1742 = vmatprep.subr.bf16.mxu0 0
    %1743 = vmatpush1.bf16.msra.mxu0 0
    %1744 = vmatprep.subr.bf16.mxu0 0
    %1745 = vmatpush1.bf16.msra.mxu0 0
    %1746 = vmatprep.subr.bf16.mxu0 0
    %1747 = vmatpush1.bf16.msra.mxu0 0
    %1748 = vmatprep.subr.bf16.mxu0 0
    %1749 = vmatpush1.bf16.msra.mxu0 0
    %1750 = vmatprep.subr.bf16.mxu0 0
    %1751 = vmatpush1.bf16.msra.mxu0 0
    %1752 = vmatprep.subr.bf16.mxu0 0
    %1753 = vmatpush1.bf16.msra.mxu0 0
    %1754 = vmatprep.mubr.bf16.mxu0 0
    %1755 = vmatmul.mubr.bf16.gmra.mrb[0].mxu0 %v1717
    %v1756 = vpop.f32.mrb[0].mxu0
    %v1757 = vadd.f32 0.0, %v1756
    %v1758 = vpop.f32.mrb[0].mxu0
    %v1759 = vpop.f32.mrb[0].mxu0
    %v1760 = vpop.f32.mrb[0].mxu0
    %1761 = vdwg.mxu0
    %v1762 = vpack.c.bf16 %v1481, %v1435
    %v1763 = vld [vmem:[%s9] sm:$0xf]
    %v1764 = vpack.c.bf16 %v1573, %v1527
    %s1765 = scalar_lea.vmem %s9, 4
    %v1766 = vld [vmem:[%s1765] sm:$0xf]
    %v1768 = vsel %vm920, %v1764, 0
    %v1771 = vsel %vm1396, %v1766, 0
    %1773 = vmatprep.subr.bf16.mxu0 0
    %1774 = vmatpush1.bf16.msra.mxu0 %v1771
    %1775 = vmatprep.subr.bf16.mxu0 0
    %1776 = vmatpush1.bf16.msra.mxu0 0
    %1777 = vmatprep.subr.bf16.mxu0 0
    %1778 = vmatpush1.bf16.msra.mxu0 0
    %1779 = vmatprep.subr.bf16.mxu0 0
    %1780 = vmatpush1.bf16.msra.mxu0 0
    %1781 = vmatprep.subr.bf16.mxu0 0
    %1782 = vmatpush1.bf16.msra.mxu0 0
    %1783 = vmatprep.subr.bf16.mxu0 0
    %1784 = vmatpush1.bf16.msra.mxu0 0
    %1785 = vmatprep.subr.bf16.mxu0 0
    %1786 = vmatpush1.bf16.msra.mxu0 0
    %1787 = vmatprep.subr.bf16.mxu0 0
    %1788 = vmatpush1.bf16.msra.mxu0 0
    %1789 = vmatprep.subr.bf16.mxu0 0
    %1790 = vmatpush1.bf16.msra.mxu0 0
    %1791 = vmatprep.subr.bf16.mxu0 0
    %1792 = vmatpush1.bf16.msra.mxu0 0
    %1793 = vmatprep.subr.bf16.mxu0 0
    %1794 = vmatpush1.bf16.msra.mxu0 0
    %1795 = vmatprep.subr.bf16.mxu0 0
    %1796 = vmatpush1.bf16.msra.mxu0 0
    %1797 = vmatprep.subr.bf16.mxu0 0
    %1798 = vmatpush1.bf16.msra.mxu0 0
    %1799 = vmatprep.subr.bf16.mxu0 0
    %1800 = vmatpush1.bf16.msra.mxu0 0
    %1801 = vmatprep.subr.bf16.mxu0 0
    %1802 = vmatpush1.bf16.msra.mxu0 0
    %1803 = vmatprep.subr.bf16.mxu0 0
    %1804 = vmatpush1.bf16.msra.mxu0 0
    %1805 = vmatprep.mubr.bf16.mxu0 0
    %1806 = vmatmul.mubr.bf16.gmra.mrb[0].mxu0 %v1768
    %v1807 = vpop.f32.mrb[0].mxu0
    %v1808 = vadd.f32 0.0, %v1807
    %v1809 = vpop.f32.mrb[0].mxu0
    %v1810 = vpop.f32.mrb[0].mxu0
    %v1811 = vadd.f32 0.0, %v1810
    %v1812 = vpop.f32.mrb[0].mxu0
    %1813 = vdwg.mxu0
    %v1815 = vsel %vm920, %v1762, 0
    %v1818 = vsel %vm1396, %v1763, 0
    %1820 = vmatprep.subr.bf16.mxu0 0
    %1821 = vmatpush1.bf16.msra.mxu0 %v1818
    %1822 = vmatprep.subr.bf16.mxu0 0
    %1823 = vmatpush1.bf16.msra.mxu0 0
    %1824 = vmatprep.subr.bf16.mxu0 0
    %1825 = vmatpush1.bf16.msra.mxu0 0
    %1826 = vmatprep.subr.bf16.mxu0 0
    %1827 = vmatpush1.bf16.msra.mxu0 0
    %1828 = vmatprep.subr.bf16.mxu0 0
    %1829 = vmatpush1.bf16.msra.mxu0 0
    %1830 = vmatprep.subr.bf16.mxu0 0
    %1831 = vmatpush1.bf16.msra.mxu0 0
    %1832 = vmatprep.subr.bf16.mxu0 0
    %1833 = vmatpush1.bf16.msra.mxu0 0
    %1834 = vmatprep.subr.bf16.mxu0 0
    %1835 = vmatpush1.bf16.msra.mxu0 0
    %1836 = vmatprep.subr.bf16.mxu0 0
    %1837 = vmatpush1.bf16.msra.mxu0 0
    %1838 = vmatprep.subr.bf16.mxu0 0
    %1839 = vmatpush1.bf16.msra.mxu0 0
    %1840 = vmatprep.subr.bf16.mxu0 0
    %1841 = vmatpush1.bf16.msra.mxu0 0
    %1842 = vmatprep.subr.bf16.mxu0 0
    %1843 = vmatpush1.bf16.msra.mxu0 0
    %1844 = vmatprep.subr.bf16.mxu0 0
    %1845 = vmatpush1.bf16.msra.mxu0 0
    %1846 = vmatprep.subr.bf16.mxu0 0
    %1847 = vmatpush1.bf16.msra.mxu0 0
    %1848 = vmatprep.subr.bf16.mxu0 0
    %1849 = vmatpush1.bf16.msra.mxu0 0
    %1850 = vmatprep.subr.bf16.mxu0 0
    %1851 = vmatpush1.bf16.msra.mxu0 0
    %1852 = vmatprep.mubr.bf16.mxu0 0
    %1853 = vmatmul.mubr.bf16.gmra.mrb[0].mxu0 %v1815
    %v1854 = vpop.f32.mrb[0].mxu0
    %v1855 = vadd.f32 %v1808, %v1854
    %v1856 = vpop.f32.mrb[0].mxu0
    %v1857 = vpop.f32.mrb[0].mxu0
    %v1858 = vadd.f32 %v1811, %v1857
    %v1859 = vpop.f32.mrb[0].mxu0
    %1860 = vdwg.mxu0
    %v1861 = vpack.c.bf16 %v1665, %v1619
    %s1862 = scalar_lea.vmem %s9, 8
    %v1863 = vld [vmem:[%s1862] sm:$0xf]
    %v1865 = vsel %vm920, %v1861, 0
    %v1868 = vsel %vm1396, %v1863, 0
    %1870 = vmatprep.subr.bf16.mxu0 0
    %1871 = vmatpush1.bf16.msra.mxu0 %v1868
    %1872 = vmatprep.subr.bf16.mxu0 0
    %1873 = vmatpush1.bf16.msra.mxu0 0
    %1874 = vmatprep.subr.bf16.mxu0 0
    %1875 = vmatpush1.bf16.msra.mxu0 0
    %1876 = vmatprep.subr.bf16.mxu0 0
    %1877 = vmatpush1.bf16.msra.mxu0 0
    %1878 = vmatprep.subr.bf16.mxu0 0
    %1879 = vmatpush1.bf16.msra.mxu0 0
    %1880 = vmatprep.subr.bf16.mxu0 0
    %1881 = vmatpush1.bf16.msra.mxu0 0
    %1882 = vmatprep.subr.bf16.mxu0 0
    %1883 = vmatpush1.bf16.msra.mxu0 0
    %1884 = vmatprep.subr.bf16.mxu0 0
    %1885 = vmatpush1.bf16.msra.mxu0 0
    %1886 = vmatprep.subr.bf16.mxu0 0
    %1887 = vmatpush1.bf16.msra.mxu0 0
    %1888 = vmatprep.subr.bf16.mxu0 0
    %1889 = vmatpush1.bf16.msra.mxu0 0
    %1890 = vmatprep.subr.bf16.mxu0 0
    %1891 = vmatpush1.bf16.msra.mxu0 0
    %1892 = vmatprep.subr.bf16.mxu0 0
    %1893 = vmatpush1.bf16.msra.mxu0 0
    %1894 = vmatprep.subr.bf16.mxu0 0
    %1895 = vmatpush1.bf16.msra.mxu0 0
    %1896 = vmatprep.subr.bf16.mxu0 0
    %1897 = vmatpush1.bf16.msra.mxu0 0
    %1898 = vmatprep.subr.bf16.mxu0 0
    %1899 = vmatpush1.bf16.msra.mxu0 0
    %1900 = vmatprep.subr.bf16.mxu0 0
    %1901 = vmatpush1.bf16.msra.mxu0 0
    %1902 = vmatprep.mubr.bf16.mxu0 0
    %1903 = vmatmul.mubr.bf16.gmra.mrb[0].mxu0 %v1865
    %v1904 = vpop.f32.mrb[0].mxu0
    %v1905 = vadd.f32 0.0, %v1904
    %v1906 = vpop.f32.mrb[0].mxu0
    %v1907 = vpop.f32.mrb[0].mxu0
    %v1908 = vadd.f32 0.0, %v1907
    %v1909 = vpop.f32.mrb[0].mxu0
    %1910 = vdwg.mxu0
    %v1911 = vadd.f32 %v1855, %v1905
    %v1912 = vadd.f32 %v1858, %v1908
    %v1913 = vpack.c.bf16 %v1757, %v1711
    %s1914 = scalar_lea.vmem %s9, 12
    %v1915 = vld [vmem:[%s1914] sm:$0xf]
    %v1917 = vsel %vm920, %v1913, 0
    %v1920 = vsel %vm1396, %v1915, 0
    %1922 = vmatprep.subr.bf16.mxu0 0
    %1923 = vmatpush1.bf16.msra.mxu0 %v1920
    %1924 = vmatprep.subr.bf16.mxu0 0
    %1925 = vmatpush1.bf16.msra.mxu0 0
    %1926 = vmatprep.subr.bf16.mxu0 0
    %1927 = vmatpush1.bf16.msra.mxu0 0
    %1928 = vmatprep.subr.bf16.mxu0 0
    %1929 = vmatpush1.bf16.msra.mxu0 0
    %1930 = vmatprep.subr.bf16.mxu0 0
    %1931 = vmatpush1.bf16.msra.mxu0 0
    %1932 = vmatprep.subr.bf16.mxu0 0
    %1933 = vmatpush1.bf16.msra.mxu0 0
    %1934 = vmatprep.subr.bf16.mxu0 0
    %1935 = vmatpush1.bf16.msra.mxu0 0
    %1936 = vmatprep.subr.bf16.mxu0 0
    %1937 = vmatpush1.bf16.msra.mxu0 0
    %1938 = vmatprep.subr.bf16.mxu0 0
    %1939 = vmatpush1.bf16.msra.mxu0 0
    %1940 = vmatprep.subr.bf16.mxu0 0
    %1941 = vmatpush1.bf16.msra.mxu0 0
    %1942 = vmatprep.subr.bf16.mxu0 0
    %1943 = vmatpush1.bf16.msra.mxu0 0
    %1944 = vmatprep.subr.bf16.mxu0 0
    %1945 = vmatpush1.bf16.msra.mxu0 0
    %1946 = vmatprep.subr.bf16.mxu0 0
    %1947 = vmatpush1.bf16.msra.mxu0 0
    %1948 = vmatprep.subr.bf16.mxu0 0
    %1949 = vmatpush1.bf16.msra.mxu0 0
    %1950 = vmatprep.subr.bf16.mxu0 0
    %1951 = vmatpush1.bf16.msra.mxu0 0
    %1952 = vmatprep.subr.bf16.mxu0 0
    %1953 = vmatpush1.bf16.msra.mxu0 0
    %1954 = vmatprep.mubr.bf16.mxu0 0
    %1955 = vmatmul.mubr.bf16.gmra.mrb[0].mxu0 %v1917
    %v1956 = vpop.f32.mrb[0].mxu0
    %v1957 = vadd.f32 0.0, %v1956
    %v1958 = vpop.f32.mrb[0].mxu0
    %v1959 = vpop.f32.mrb[0].mxu0
    %v1960 = vadd.f32 0.0, %v1959
    %v1961 = vpop.f32.mrb[0].mxu0
    %1962 = vdwg.mxu0
    %v1963 = vadd.f32 %v1911, %v1957
    %v1964 = vadd.f32 %v1912, %v1960
    %v1965 = vadd.f32 %v58, %v1963
    %v1966 = vadd.f32 %v59, %v1964
    %v1967 = vld [vmem:[%s10] sm:$0x1]
    %v1969 = vlaneseq
    %v1970 = vshrl.u32 %v1969, 7
    %v1971 = vsub.s32 0, %v1970
    %v1972 = vrot.slane %v1967, %v1971
    %v1974 = vadd.f32 %v1965, %v1972
    %v1975 = vadd.f32 %v1966, %v1972
    %v1976 = vld [vmem:[%s11] sm:$0x1]
    %v1977 = vld [vmem:[%s12] sm:$0x1]
    %v1978 = vsel %vm62, %v1974, 0.0
    %1979 = vadd.xlane.f32.xlu0 %v1978
    %v1980 = vpop.xlane.xlu0 %1979
    %v1981 = vsel %vm62, %v1975, 0.0
    %1982 = vadd.xlane.f32.xlu0 %v1981
    %v1983 = vpop.xlane.xlu0 %1982
    %v1984 = vmul.f32 %v1980, %v69
    %v1985 = vmul.f32 %v1983, %v69
    %v1986 = vsub.f32 %v1974, %v1984
    %v1987 = vsub.f32 %v1975, %v1985
    %v1988 = vmul.f32 %v1986, %v1986
    %v1989 = vmul.f32 %v1987, %v1987
    %v1990 = vsel %vm62, %v1988, 0.0
    %1991 = vadd.xlane.f32.xlu0 %v1990
    %v1992 = vpop.xlane.xlu0 %1991
    %v1993 = vsel %vm62, %v1989, 0.0
    %1994 = vadd.xlane.f32.xlu0 %v1993
    %v1995 = vpop.xlane.xlu0 %1994
    %v1996 = vmul.f32 %v1992, %v69
    %v1997 = vmul.f32 %v1995, %v69
    %v1998 = vadd.f32 %v1996, 1e-05
    %v1999 = vadd.f32 %v1997, 1e-05
    %v2000 = vrsqrt.pop %v1998
    %v2001 = vrsqrt.pop %v1999
    %v2002 = vmul.f32 %v1986, %v2000
    %v2003 = vmul.f32 %v1987, %v2001
    %v2005 = vlaneseq
    %v2006 = vshrl.u32 %v2005, 7
    %v2007 = vsub.s32 0, %v2006
    %v2008 = vrot.slane %v1976, %v2007
    %v2010 = vmul.f32 %v2002, %v2008
    %v2011 = vmul.f32 %v2003, %v2008
    %v2013 = vlaneseq
    %v2014 = vshrl.u32 %v2013, 7
    %v2015 = vsub.s32 0, %v2014
    %v2016 = vrot.slane %v1977, %v2015
    %v2018 = vadd.f32 %v2010, %v2016
    %v2019 = vadd.f32 %v2011, %v2016
    %v2020 = vpack.c.bf16 %v2019, %v2018
    %v2021 = vld [vmem:[%s13] sm:$0xf]
    %v2022 = vld [vmem:[%s13 + $0x4] sm:$0xf]
    %v2023 = vld [vmem:[%s13 + $0x8] sm:$0xf]
    %v2024 = vld [vmem:[%s13 + $0xc] sm:$0xf]
    %v2025 = vld [vmem:[%s14] sm:$0x1]
    %v2027 = vlaneseq
    %v2028 = vshrl.u32 %v2027, 7
    %v2029 = vsub.s32 0, %v2028
    %v2030 = vrot.slane %v2025, %v2029
    %v2036 = vunpack.c.l.b16 %v2021
    %v2037 = vunpack.c.l.b16 %v2022
    %v2038 = vunpack.c.l.b16 %v2023
    %v2039 = vunpack.c.l.b16 %v2024
    %v2040 = vpack.c.b16 %v2037, %v2036
    %v2041 = vpack.c.b16 %v2039, %v2038
    %v2045 = vsel %vm62, %v2020, 0
    %2047 = vmatprep.subr.bf16.mxu0 0
    %2048 = vmatpush1.bf16.msra.mxu0 %v2040
    %2049 = vmatprep.subr.bf16.mxu0 0
    %2050 = vmatpush1.bf16.msra.mxu0 %v2041
    %2051 = vmatprep.subr.bf16.mxu0 0
    %2052 = vmatpush1.bf16.msra.mxu0 0
    %2053 = vmatprep.subr.bf16.mxu0 0
    %2054 = vmatpush1.bf16.msra.mxu0 0
    %2055 = vmatprep.subr.bf16.mxu0 0
    %2056 = vmatpush1.bf16.msra.mxu0 0
    %2057 = vmatprep.subr.bf16.mxu0 0
    %2058 = vmatpush1.bf16.msra.mxu0 0
    %2059 = vmatprep.subr.bf16.mxu0 0
    %2060 = vmatpush1.bf16.msra.mxu0 0
    %2061 = vmatprep.subr.bf16.mxu0 0
    %2062 = vmatpush1.bf16.msra.mxu0 0
    %2063 = vmatprep.subr.bf16.mxu0 0
    %2064 = vmatpush1.bf16.msra.mxu0 0
    %2065 = vmatprep.subr.bf16.mxu0 0
    %2066 = vmatpush1.bf16.msra.mxu0 0
    %2067 = vmatprep.subr.bf16.mxu0 0
    %2068 = vmatpush1.bf16.msra.mxu0 0
    %2069 = vmatprep.subr.bf16.mxu0 0
    %2070 = vmatpush1.bf16.msra.mxu0 0
    %2071 = vmatprep.subr.bf16.mxu0 0
    %2072 = vmatpush1.bf16.msra.mxu0 0
    %2073 = vmatprep.subr.bf16.mxu0 0
    %2074 = vmatpush1.bf16.msra.mxu0 0
    %2075 = vmatprep.subr.bf16.mxu0 0
    %2076 = vmatpush1.bf16.msra.mxu0 0
    %2077 = vmatprep.subr.bf16.mxu0 0
    %2078 = vmatpush1.bf16.msra.mxu0 0
    %2079 = vmatprep.mubr.bf16.mxu0 0
    %2080 = vmatmul.mubr.bf16.gmra.mrb[0].mxu0 %v2045
    %v2081 = vpop.f32.mrb[0].mxu0
    %v2082 = vadd.f32 %v2030, %v2081
    %v2083 = vpop.f32.mrb[0].mxu0
    %v2084 = vpop.f32.mrb[0].mxu0
    %v2085 = vadd.f32 %v2030, %v2084
    %v2086 = vpop.f32.mrb[0].mxu0
    %2087 = vdwg.mxu0
    %v2088 = vmul.f32 %v2082, 0.5
    %v2089 = vmul.f32 %v2085, 0.5
    %v2090 = vmul.f32 %v2082, 0.70710677
    %v2091 = vmul.f32 %v2085, 0.70710677
    %v2092 = verf.f32.pop %v2090
    %v2093 = verf.f32.pop %v2091
    %v2094 = vadd.f32 %v2092, 1.0
    %v2095 = vadd.f32 %v2093, 1.0
    %v2096 = vmul.f32 %v2088, %v2094
    %v2097 = vmul.f32 %v2089, %v2095
    %v2098 = vpack.c.bf16 %v2097, %v2096
    %v2099 = vld [vmem:[%s15] sm:$0xf]
    %v2100 = vld [vmem:[%s15 + $0x4] sm:$0xf]
    %v2101 = vld [vmem:[%s15 + $0x8] sm:$0xf]
    %v2102 = vld [vmem:[%s15 + $0xc] sm:$0xf]
    %v2103 = vld [vmem:[%s15 + $0x10] sm:$0xf]
    %v2104 = vld [vmem:[%s15 + $0x14] sm:$0xf]
    %v2105 = vld [vmem:[%s15 + $0x18] sm:$0xf]
    %v2106 = vld [vmem:[%s15 + $0x1c] sm:$0xf]
    %v2107 = vld [vmem:[%s15 + $0x20] sm:$0xf]
    %v2108 = vld [vmem:[%s15 + $0x24] sm:$0xf]
    %v2109 = vld [vmem:[%s15 + $0x28] sm:$0xf]
    %v2110 = vld [vmem:[%s15 + $0x2c] sm:$0xf]
    %v2111 = vld [vmem:[%s15 + $0x30] sm:$0xf]
    %v2112 = vld [vmem:[%s15 + $0x34] sm:$0xf]
    %v2113 = vld [vmem:[%s15 + $0x38] sm:$0xf]
    %v2114 = vld [vmem:[%s15 + $0x3c] sm:$0xf]
    %v2115 = vld [vmem:[%s16] sm:$0x1]
    %v2117 = vlaneseq
    %v2118 = vshrl.u32 %v2117, 7
    %v2119 = vsub.s32 0, %v2118
    %v2120 = vrot.slane %v2115, %v2119
    %v2138 = vunpack.c.l.b16 %v2099
    %v2139 = vunpack.c.l.b16 %v2100
    %v2140 = vunpack.c.l.b16 %v2101
    %v2141 = vunpack.c.l.b16 %v2102
    %v2142 = vunpack.c.l.b16 %v2103
    %v2143 = vunpack.c.l.b16 %v2104
    %v2144 = vunpack.c.l.b16 %v2105
    %v2145 = vunpack.c.l.b16 %v2106
    %v2146 = vunpack.c.l.b16 %v2107
    %v2147 = vunpack.c.l.b16 %v2108
    %v2148 = vunpack.c.l.b16 %v2109
    %v2149 = vunpack.c.l.b16 %v2110
    %v2150 = vunpack.c.l.b16 %v2111
    %v2151 = vunpack.c.l.b16 %v2112
    %v2152 = vunpack.c.l.b16 %v2113
    %v2153 = vunpack.c.l.b16 %v2114
    %v2154 = vpack.c.b16 %v2139, %v2138
    %v2155 = vpack.c.b16 %v2141, %v2140
    %v2156 = vpack.c.b16 %v2143, %v2142
    %v2157 = vpack.c.b16 %v2145, %v2144
    %v2158 = vpack.c.b16 %v2147, %v2146
    %v2159 = vpack.c.b16 %v2149, %v2148
    %v2160 = vpack.c.b16 %v2151, %v2150
    %v2161 = vpack.c.b16 %v2153, %v2152
    %2170 = vmatprep.subr.bf16.mxu0 0
    %2171 = vmatpush1.bf16.msra.mxu0 %v2154
    %2172 = vmatprep.subr.bf16.mxu0 0
    %2173 = vmatpush1.bf16.msra.mxu0 %v2155
    %2174 = vmatprep.subr.bf16.mxu0 0
    %2175 = vmatpush1.bf16.msra.mxu0 %v2156
    %2176 = vmatprep.subr.bf16.mxu0 0
    %2177 = vmatpush1.bf16.msra.mxu0 %v2157
    %2178 = vmatprep.subr.bf16.mxu0 0
    %2179 = vmatpush1.bf16.msra.mxu0 %v2158
    %2180 = vmatprep.subr.bf16.mxu0 0
    %2181 = vmatpush1.bf16.msra.mxu0 %v2159
    %2182 = vmatprep.subr.bf16.mxu0 0
    %2183 = vmatpush1.bf16.msra.mxu0 %v2160
    %2184 = vmatprep.subr.bf16.mxu0 0
    %2185 = vmatpush1.bf16.msra.mxu0 %v2161
    %2186 = vmatprep.subr.bf16.mxu0 0
    %2187 = vmatpush1.bf16.msra.mxu0 0
    %2188 = vmatprep.subr.bf16.mxu0 0
    %2189 = vmatpush1.bf16.msra.mxu0 0
    %2190 = vmatprep.subr.bf16.mxu0 0
    %2191 = vmatpush1.bf16.msra.mxu0 0
    %2192 = vmatprep.subr.bf16.mxu0 0
    %2193 = vmatpush1.bf16.msra.mxu0 0
    %2194 = vmatprep.subr.bf16.mxu0 0
    %2195 = vmatpush1.bf16.msra.mxu0 0
    %2196 = vmatprep.subr.bf16.mxu0 0
    %2197 = vmatpush1.bf16.msra.mxu0 0
    %2198 = vmatprep.subr.bf16.mxu0 0
    %2199 = vmatpush1.bf16.msra.mxu0 0
    %2200 = vmatprep.subr.bf16.mxu0 0
    %2201 = vmatpush1.bf16.msra.mxu0 0
    %2202 = vmatprep.mubr.bf16.mxu0 0
    %2203 = vmatmul.mubr.bf16.gmra.mrb[0].mxu0 %v2098
    %v2204 = vpop.f32.mrb[0].mxu0
    %v2205 = vadd.f32 %v2120, %v2204
    %v2206 = vpop.f32.mrb[0].mxu0
    %v2207 = vpop.f32.mrb[0].mxu0
    %v2208 = vadd.f32 %v2120, %v2207
    %v2209 = vpop.f32.mrb[0].mxu0
    %2210 = vdwg.mxu0
    %v2211 = vadd.f32 %v1974, %v2205
    %v2212 = vadd.f32 %v1975, %v2208
    %2213 = vst.msk [vmem:[#allocation2] sm:$0xff] %vm62, %v2211
    %2214 = vst.msk [vmem:[#allocation2 + $0x8] sm:$0xff] %vm62, %v2212
    // Predicated region
    $region70: #{tpu_custom_call.1} parent=1 // pred_check
      _
    $region71: #{tpu_custom_call.1} parent=1 // pred_check_branch
      %2216 = sbr.rel (0) target = $region73
    $region72: #{tpu_custom_call.1} parent=1 // pred_region
      %s2218 = ssub.s32 256, 256
      %2219 = vsyncadd [#allocation3], %s2218
      %s2220 = sshll.u32 [#allocation2], 4
      %s2221 = int_to_ptr.vmem [resolvable:$true] %s2220
      %2226 = dma.vmem_to_hbm [thread:$0]  %s2221, 256, %s17, [#allocation3], 128, 128, 8
    $region73: #{tpu_custom_call.1} parent=1 // pred_fallthru
      _
    // Predicated region
    $region74: #{tpu_custom_call.1} parent=1 // pred_check
      _
    $region75: #{tpu_custom_call.1} parent=1 // pred_check_branch
      %2228 = sbr.rel (0) target = $region77
    $region76: #{tpu_custom_call.1} parent=1 // pred_region
      %2229 = dma.done [#allocation3], 256
    $region77: #{tpu_custom_call.1} parent=1 // pred_fallthru
      _
    %2230 = vsyncpa [#allocation3], 1

</llo_original>
